<compile_context>
chip_gen: v7x
topology: tpu7x:2x2x1
jax: 0.10.0
libtpu: 0.0.40
codegen_flags: <defaults>
</compile_context>

<pallas_src>
import functools

import jax
import jax.numpy as jnp
from jax.experimental import pallas as pl
from jax.experimental.pallas import tpu as pltpu


def _sdpa_kernel(*refs, inv_temperature, has_mask, emit_attn):
    """One grid step = GB batch elements x GH heads x TQ query rows.

    Ref shapes:
      q_ref: (GB, GH, TQ, Dk)   k_ref: (GB, GH, Lk, Dk)   v_ref: (GB, GH, Lk, Dv)
      m_ref: (GB, 1, TQ, Lk) or (GB, GH, TQ, Lk)           (optional, f32)
      o_ref: (GB, GH, TQ, Dv)   a_ref: (GB, GH, TQ, Lk)    (optional)
    """
    it = iter(refs)
    q_ref = next(it)
    k_ref = next(it)
    v_ref = next(it)
    m_ref = next(it) if has_mask else None
    o_ref = next(it)
    a_ref = next(it) if emit_attn else None

    GB, GH, TQ, Dk = q_ref.shape
    Lk = k_ref.shape[2]
    Dv = v_ref.shape[3]

    # Collapse (GB, GH) -> one leading batch dim (leading-dim reshape only, the
    # (sublane, lane) layout of the last two dims is untouched).
    q = q_ref[...].reshape(GB * GH, TQ, Dk)
    k = k_ref[...].reshape(GB * GH, Lk, Dk)

    # scores: MXU in the input dtype, f32 accumulation, contraction on the last
    # dims of q and k (no explicit transpose of k).
    s = jax.lax.dot_general(
        q, k, dimension_numbers=(((2,), (2,)), ((0,), (0,))),
        preferred_element_type=jnp.float32)
    s = s.reshape(GB, GH, TQ, Lk) * jnp.float32(inv_temperature)

    if has_mask:
        m = m_ref[...]                                      # f32, 0.0 => masked
        s = jnp.where(m != 0.0, s, jnp.float32(-1e9))       # exact masked_fill

    # numerically stable softmax over the key axis (f32 intermediates only)
    s_max = jnp.max(s, axis=-1, keepdims=True)
    p = jnp.exp(s - s_max)
    denom = jnp.sum(p, axis=-1, keepdims=True)
    # Exact reciprocal when attn is returned (approx vrcp is not accurate enough
    # for the returned probabilities); approximate (EUP slot) when discarded.
    inv = pl.reciprocal(denom, approx=not emit_attn)
    attn = p * inv                                          # (GB, GH, TQ, Lk)

    v = v_ref[...].reshape(GB * GH, Lk, Dv)
    out = jax.lax.dot_general(
        attn.reshape(GB * GH, TQ, Lk).astype(v.dtype), v,
        dimension_numbers=(((2,), (1,)), ((0,), (0,))),
        preferred_element_type=jnp.float32)
    o_ref[...] = out.reshape(GB, GH, TQ, Dv).astype(o_ref.dtype)
    if emit_attn:
        a_ref[...] = attn.astype(a_ref.dtype)


def _pick_tq(lq):
    """Query-tile size: full Lq for small shapes, else a 128-multiple divisor."""
    if lq <= 1024:
        return lq
    for t in (1024, 512, 256, 128):
        if lq % t == 0:
            return t
    return lq  # irregular large Lq: fall back to a single tile


def _largest_divisor_under(n, per_unit_bytes, budget):
    """Largest divisor d of n with d * per_unit_bytes <= budget (at least 1)."""
    cap = max(1, min(n, int(budget // max(per_unit_bytes, 1))))
    best = 1
    for d in range(1, cap + 1):
        if n % d == 0:
            best = d
    return best


def scaled_dot_product_attention(q, k, v, mask=None, *, temperature,
                                 return_attn=True):
    """Pallas TPU forward of ScaledDotProductAttention.

    q: (B, H, Lq, Dk), k: (B, H, Lk, Dk), v: (B, H, Lk, Dv)
    mask: optional, broadcastable to (B, 1, Lq, Lk) (or (B, H, Lq, Lk)); 0 => masked.
    Returns (output, attn) like the PyTorch module; attn is None when
    return_attn=False (NeRF discards it).
    """
    B, H, Lq, Dk = q.shape
    Lk, Dv = v.shape[2], v.shape[3]
    assert k.shape == (B, H, Lk, Dk)
    assert v.shape == (B, H, Lk, Dv)

    inv_temperature = 1.0 / float(temperature)
    TQ = _pick_tq(Lq)

    # Per-(batch, head) working set of one grid step: double-buffered q/k/v/out
    # blocks + f32 softmax temporaries + optional attn output block.
    in_bytes = jnp.dtype(q.dtype).itemsize
    per_bh = (TQ * Dk + Lk * Dk + Lk * Dv + TQ * Dv) * in_bytes
    per_bh += 2 * TQ * Lk * 4                 # f32 score / prob temps
    if return_attn:
        per_bh += TQ * Lk * in_bytes          # attn output block
    if mask is not None:
        per_bh += TQ * Lk * 4                 # (over-counts per head, harmless)
    per_bh *= 2                               # double buffering

    budget = 2 * 1024 * 1024
    GH = _largest_divisor_under(H, per_bh, budget)
    GB = _largest_divisor_under(B, GH * per_bh, budget)

    grid = (B // GB, H // GH, Lq // TQ)

    q_spec = pl.BlockSpec((GB, GH, TQ, Dk), lambda b, g, t: (b, g, t, 0))
    k_spec = pl.BlockSpec((GB, GH, Lk, Dk), lambda b, g, t: (b, g, 0, 0))
    v_spec = pl.BlockSpec((GB, GH, Lk, Dv), lambda b, g, t: (b, g, 0, 0))
    o_spec = pl.BlockSpec((GB, GH, TQ, Dv), lambda b, g, t: (b, g, t, 0))
    a_spec = pl.BlockSpec((GB, GH, TQ, Lk), lambda b, g, t: (b, g, t, 0))

    in_specs = [q_spec, k_spec, v_spec]
    args = [q, k, v]
    if mask is not None:
        m = jnp.asarray(mask)
        try:
            # Common case (what MultiHeadAttention produces): mask does not vary
            # per head -> keep it compact; one block is shared by all GH heads.
            m = jnp.broadcast_to(m, (B, 1, Lq, Lk)).astype(jnp.float32)
            m_spec = pl.BlockSpec((GB, 1, TQ, Lk), lambda b, g, t: (b, 0, t, 0))
        except ValueError:
            # Per-head mask fallback.
            m = jnp.broadcast_to(m, (B, H, Lq, Lk)).astype(jnp.float32)
            m_spec = pl.BlockSpec((GB, GH, TQ, Lk), lambda b, g, t: (b, g, t, 0))
        in_specs.append(m_spec)
        args.append(m)

    out_shapes = [jax.ShapeDtypeStruct((B, H, Lq, Dv), q.dtype)]
    out_specs = [o_spec]
    if return_attn:
        # attn is returned in the input dtype (matches the PyTorch module).
        out_shapes.append(jax.ShapeDtypeStruct((B, H, Lq, Lk), q.dtype))
        out_specs.append(a_spec)

    kernel = functools.partial(
        _sdpa_kernel,
        inv_temperature=inv_temperature,
        has_mask=mask is not None,
        emit_attn=return_attn)

    outs = pl.pallas_call(
        kernel,
        out_shape=tuple(out_shapes),
        grid=grid,
        in_specs=in_specs,
        out_specs=tuple(out_specs),
        compiler_params=pltpu.CompilerParams(
            dimension_semantics=("parallel", "parallel", "parallel"),
            vmem_limit_bytes=32 * 1024 * 1024),
    )(*args)

    if return_attn:
        out, attn = outs
        return out, attn
    if isinstance(outs, (tuple, list)):
        (out,) = outs
    else:
        out = outs
    return out, None


def _reference(q, k, v, mask, temperature):
    attn = jnp.einsum("bhqd,bhkd->bhqk", q / temperature, k)
    if mask is not None:
        attn = jnp.where(mask == 0, -1e9, attn)
    attn = jax.nn.softmax(attn, axis=-1)
    out = jnp.einsum("bhqk,bhkd->bhqd", attn, v)
    return out, attn


if __name__ == "__main__":
    # Small deterministic example: batch=2, heads=4, seq=8, d_k=d_v=32
    B, H, L, Dk, Dv = 2, 4, 8, 32, 32
    temperature = float(Dk) ** 0.5

    key = jax.random.PRNGKey(0)
    kq, kk, kv, km = jax.random.split(key, 4)
    q = jax.random.normal(kq, (B, H, L, Dk), dtype=jnp.float32)
    k = jax.random.normal(kk, (B, H, L, Dk), dtype=jnp.float32)
    v = jax.random.normal(kv, (B, H, L, Dv), dtype=jnp.float32)
    mask = (jax.random.uniform(km, (B, 1, L, L)) > 0.2).astype(jnp.int32)
    # avoid fully-masked rows (degenerate case, never produced by the module)
    mask = mask.at[..., 0].set(1)

    # --- no mask, attn returned ---
    out, attn = scaled_dot_product_attention(q, k, v, temperature=temperature)
    jax.block_until_ready((out, attn))
    out_ref, attn_ref = _reference(q, k, v, None, temperature)
    assert jnp.allclose(out, out_ref, atol=2e-3, rtol=2e-3)
    assert jnp.allclose(attn, attn_ref, atol=2e-3, rtol=2e-3)

    # --- masked path ---
    out_m, attn_m = scaled_dot_product_attention(
        q, k, v, mask=mask, temperature=temperature)
    jax.block_until_ready((out_m, attn_m))
    out_mref, attn_mref = _reference(q, k, v, mask, temperature)
    assert jnp.allclose(out_m, out_mref, atol=2e-3, rtol=2e-3)
    assert jnp.allclose(attn_m, attn_mref, atol=2e-3, rtol=2e-3)

    # --- NeRF-style path: attn discarded, bf16 operands on the MXU ---
    qb, kb, vb = (x.astype(jnp.bfloat16) for x in (q, k, v))
    out_b, attn_none = scaled_dot_product_attention(
        qb, kb, vb, mask=mask, temperature=temperature, return_attn=False)
    out_b = jax.block_until_ready(out_b)
    assert attn_none is None
    out_bref, _ = _reference(qb.astype(jnp.float32), kb.astype(jnp.float32),
                             vb.astype(jnp.float32), mask, temperature)
    assert jnp.allclose(out_b.astype(jnp.float32), out_bref, atol=2e-2, rtol=2e-2)

    print("KERNEL_OK")
</pallas_src>

<mosaic_0001>
module attributes {stable_mosaic.version = 11 : i64} {
  func.func @_sdpa_kernel(%arg0: i32, %arg1: i32, %arg2: i32, %arg3: memref<2x4x8x32xf32, #tpu.memory_space<vmem>>, %arg4: memref<2x4x8x32xf32, #tpu.memory_space<vmem>>, %arg5: memref<2x4x8x32xf32, #tpu.memory_space<vmem>>, %arg6: memref<2x4x8x32xf32, #tpu.memory_space<vmem>>, %arg7: memref<2x4x8x8xf32, #tpu.memory_space<vmem>>) attributes {dimension_semantics = [#tpu.dimension_semantics<parallel>, #tpu.dimension_semantics<parallel>, #tpu.dimension_semantics<parallel>], iteration_bounds = array<i64: 1, 1, 1>, scalar_prefetch = 0 : i64, scratch_operands = 0 : i64, tpu.core_type = #tpu.core_type<tc>, window_params = [{transform_indices = @transform_0, window_bounds = array<i64: 2, 4, 8, 32>}, {transform_indices = @transform_1, window_bounds = array<i64: 2, 4, 8, 32>}, {transform_indices = @transform_2, window_bounds = array<i64: 2, 4, 8, 32>}, {transform_indices = @transform_3, window_bounds = array<i64: 2, 4, 8, 32>}, {transform_indices = @transform_4, window_bounds = array<i64: 2, 4, 8, 8>}]} {
    %c0 = arith.constant 0 : index
    %c0_0 = arith.constant 0 : index
    %c0_1 = arith.constant 0 : index
    %c0_2 = arith.constant 0 : index
    %0 = vector.load %arg3[%c0, %c0_0, %c0_1, %c0_2] : memref<2x4x8x32xf32, #tpu.memory_space<vmem>>, vector<2x4x8x32xf32>
    %1 = vector.shape_cast %0 : vector<2x4x8x32xf32> to vector<8x8x32xf32>
    %c0_3 = arith.constant 0 : index
    %c0_4 = arith.constant 0 : index
    %c0_5 = arith.constant 0 : index
    %c0_6 = arith.constant 0 : index
    %2 = vector.load %arg4[%c0_3, %c0_4, %c0_5, %c0_6] : memref<2x4x8x32xf32, #tpu.memory_space<vmem>>, vector<2x4x8x32xf32>
    %3 = vector.shape_cast %2 : vector<2x4x8x32xf32> to vector<8x8x32xf32>
    %cst = arith.constant dense<0.000000e+00> : vector<8x8x8xf32>
    %4 = tpu.matmul %1, %3, %cst {dimension_numbers = #tpu.dot_dimension_numbers<[2], [2], [1], [1], [0, 0, 0, 1, 1, 1], [0], [0]>} : vector<8x8x32xf32>, vector<8x8x32xf32>, vector<8x8x8xf32> -> vector<8x8x8xf32>
    %5 = vector.shape_cast %4 : vector<8x8x8xf32> to vector<2x4x8x8xf32>
    %cst_7 = arith.constant 0.176776692 : f32
    %6 = vector.broadcast %cst_7 : f32 to vector<2x4x8x8xf32>
    %7 = arith.mulf %5, %6 : vector<2x4x8x8xf32>
    %cst_8 = arith.constant dense<0xFF800000> : vector<2x4x8xf32>
    %8 = vector.multi_reduction <maximumf>, %7, %cst_8 [3] : vector<2x4x8x8xf32> to vector<2x4x8xf32>
    %9 = vector.shape_cast %8 : vector<2x4x8xf32> to vector<2x4x8x1xf32>
    %10 = vector.broadcast %9 : vector<2x4x8x1xf32> to vector<2x4x8x8xf32>
    %11 = arith.subf %7, %10 : vector<2x4x8x8xf32>
    %12 = math.exp %11 : vector<2x4x8x8xf32>
    %cst_9 = arith.constant dense<0.000000e+00> : vector<2x4x8xf32>
    %13 = vector.multi_reduction <add>, %12, %cst_9 [3] : vector<2x4x8x8xf32> to vector<2x4x8xf32>
    %14 = vector.shape_cast %13 : vector<2x4x8xf32> to vector<2x4x8x1xf32>
    %15 = tpu.reciprocal %14 : vector<2x4x8x1xf32> -> vector<2x4x8x1xf32>
    %16 = vector.broadcast %15 : vector<2x4x8x1xf32> to vector<2x4x8x8xf32>
    %17 = arith.mulf %12, %16 : vector<2x4x8x8xf32>
    %c0_10 = arith.constant 0 : index
    %c0_11 = arith.constant 0 : index
    %c0_12 = arith.constant 0 : index
    %c0_13 = arith.constant 0 : index
    %18 = vector.load %arg5[%c0_10, %c0_11, %c0_12, %c0_13] : memref<2x4x8x32xf32, #tpu.memory_space<vmem>>, vector<2x4x8x32xf32>
    %19 = vector.shape_cast %18 : vector<2x4x8x32xf32> to vector<8x8x32xf32>
    %20 = vector.shape_cast %17 : vector<2x4x8x8xf32> to vector<8x8x8xf32>
    %cst_14 = arith.constant dense<0.000000e+00> : vector<8x8x32xf32>
    %21 = tpu.matmul %20, %19, %cst_14 {dimension_numbers = #tpu.dot_dimension_numbers<[2], [1], [1], [2], [0, 0, 0, 1, 1, 2], [0], [0]>} : vector<8x8x8xf32>, vector<8x8x32xf32>, vector<8x8x32xf32> -> vector<8x8x32xf32>
    %22 = vector.shape_cast %21 : vector<8x8x32xf32> to vector<2x4x8x32xf32>
    %c0_15 = arith.constant 0 : index
    %c0_16 = arith.constant 0 : index
    %c0_17 = arith.constant 0 : index
    %c0_18 = arith.constant 0 : index
    %23 = vector.load %arg6[%c0_15, %c0_16, %c0_17, %c0_18] : memref<2x4x8x32xf32, #tpu.memory_space<vmem>>, vector<2x4x8x32xf32>
    tpu.vector_store %arg6[%c0_15, %c0_16, %c0_17, %c0_18], %22 {strides = array<i32>} : memref<2x4x8x32xf32, #tpu.memory_space<vmem>>, vector<2x4x8x32xf32>,
    %c0_19 = arith.constant 0 : index
    %c0_20 = arith.constant 0 : index
    %c0_21 = arith.constant 0 : index
    %c0_22 = arith.constant 0 : index
    %24 = vector.load %arg7[%c0_19, %c0_20, %c0_21, %c0_22] : memref<2x4x8x8xf32, #tpu.memory_space<vmem>>, vector<2x4x8x8xf32>
    tpu.vector_store %arg7[%c0_19, %c0_20, %c0_21, %c0_22], %17 {strides = array<i32>} : memref<2x4x8x8xf32, #tpu.memory_space<vmem>>, vector<2x4x8x8xf32>,
    return
  }
  func.func @transform_0(%arg0: i32, %arg1: i32, %arg2: i32) -> (i32, i32, i32, i32) {
    %c0_i32 = arith.constant 0 : i32
    %c0_i32_0 = arith.constant 0 : i32
    return %arg0, %arg1, %arg2, %c0_i32 : i32, i32, i32, i32
  }
  func.func @transform_1(%arg0: i32, %arg1: i32, %arg2: i32) -> (i32, i32, i32, i32) {
    %c0_i32 = arith.constant 0 : i32
    %c0_i32_0 = arith.constant 0 : i32
    %c0_i32_1 = arith.constant 0 : i32
    return %arg0, %arg1, %c0_i32, %c0_i32_0 : i32, i32, i32, i32
  }
  func.func @transform_2(%arg0: i32, %arg1: i32, %arg2: i32) -> (i32, i32, i32, i32) {
    %c0_i32 = arith.constant 0 : i32
    %c0_i32_0 = arith.constant 0 : i32
    %c0_i32_1 = arith.constant 0 : i32
    return %arg0, %arg1, %c0_i32, %c0_i32_0 : i32, i32, i32, i32
  }
  func.func @transform_3(%arg0: i32, %arg1: i32, %arg2: i32) -> (i32, i32, i32, i32) {
    %c0_i32 = arith.constant 0 : i32
    %c0_i32_0 = arith.constant 0 : i32
    return %arg0, %arg1, %arg2, %c0_i32 : i32, i32, i32, i32
  }
  func.func @transform_4(%arg0: i32, %arg1: i32, %arg2: i32) -> (i32, i32, i32, i32) {
    %c0_i32 = arith.constant 0 : i32
    %c0_i32_0 = arith.constant 0 : i32
    return %arg0, %arg1, %arg2, %c0_i32 : i32, i32, i32, i32
  }
}

</mosaic_0001>

<llo_original>
// kernel: tpu_custom_call.1
$region0: #{tpu_custom_call.1}
  #allocation0 [shape = 'u32[]', space=smem, size = 0x4, offset = 0x4, fixed_abs, tag = 'smem constant byte address 0x4 - core index']
  #allocation1 [shape = 'u32[144,128]{1,0:T(1,128)}', space=vmem, size = 0x12000, scoped, tag = 'internal scratch']
  %s0 = inlined_call_operand.hbm [shape: f32[2,4,8,32], index: 0, kind: input, shape index: {}]
  %s1 = inlined_call_operand.hbm [shape: f32[2,4,8,32], index: 1, kind: input, shape index: {}]
  %s2 = inlined_call_operand.hbm [shape: f32[2,4,8,32], index: 2, kind: input, shape index: {}]
  %s3 = inlined_call_operand.hbm [shape: f32[2,4,8,32], index: 3, kind: output, shape index: {0}]
  %s4 = inlined_call_operand.hbm [shape: f32[2,4,8,8], index: 4, kind: output, shape index: {1}]
  %5 = xla_tuple %s3, %s4
  %s6 = sld [smem:[#allocation0]]
  $region42: #{tpu_custom_call.1} parent=0
    _
  %s8 = ssub.s32 1, %s6
  %s9 = scalar_select 0, %s8, %s6
  $region1: #{tpu_custom_call.1} parent=0
    #allocation2 [shape = 'u8[32768]{0}', space=vmem, size = 0x8000, scoped, tag = 'input window, operand 0, single buffered']
    #allocation3 [shape = 's32[1]{0}', space=sflag, size = 0x4, scoped, tag = 'scoped memory for tpu_custom_call.1']
    #allocation4 [shape = 's32[1]{0}', space=sflag, size = 0x4, scoped, tag = 'scoped memory for tpu_custom_call.1']
    #allocation5 [shape = 'u8[32768]{0}', space=vmem, size = 0x8000, scoped, tag = 'input window, operand 1, single buffered']
    #allocation6 [shape = 's32[1]{0}', space=sflag, size = 0x4, scoped, tag = 'scoped memory for tpu_custom_call.1']
    #allocation7 [shape = 'u8[32768]{0}', space=vmem, size = 0x8000, scoped, tag = 'input window, operand 2, single buffered']
    #allocation8 [shape = 'u8[32768]{0}', space=vmem, size = 0x8000, scoped, tag = 'output window, operand 0, single buffered']
    #allocation9 [shape = 'u8[32768]{0}', space=vmem, size = 0x8000, scoped, tag = 'output window, operand 1, single buffered']
    #allocation10 [shape = 's32[1]{0}', space=sflag, size = 0x4, scoped, tag = 'scoped memory for tpu_custom_call.1']
    %10 = vsyncpa [#allocation3], 0
    %11 = vsyncpa [#allocation6], 0
    %12 = vsyncpa [#allocation4], 0
    %13 = vsyncpa [#allocation10], 0
    // Predicated region
    $region2: #{tpu_custom_call.1} parent=1 // pred_check
      _
    $region3: #{tpu_custom_call.1} parent=1 // pred_check_branch
      %15 = sbr.rel (0) target = $region5
    $region4: #{tpu_custom_call.1} parent=1 // pred_region
      %s17 = ssub.s32 1024, 1024
      %18 = vsyncadd [#allocation3], %s17
      %s19 = sshll.u32 [#allocation2], 4
      %s20 = int_to_ptr.vmem [resolvable:$true] %s19
      %25 = dma.hbm_to_vmem [thread:$0]  %s0, 1024, %s20, [#allocation3], 128, 128, 8
    $region5: #{tpu_custom_call.1} parent=1 // pred_fallthru
      _
    // Predicated region
    $region6: #{tpu_custom_call.1} parent=1 // pred_check
      _
    $region7: #{tpu_custom_call.1} parent=1 // pred_check_branch
      %27 = sbr.rel (0) target = $region9
    $region8: #{tpu_custom_call.1} parent=1 // pred_region
      %s29 = ssub.s32 1024, 1024
      %30 = vsyncadd [#allocation6], %s29
      %s31 = sshll.u32 [#allocation5], 4
      %s32 = int_to_ptr.vmem [resolvable:$true] %s31
      %37 = dma.hbm_to_vmem [thread:$0]  %s1, 1024, %s32, [#allocation6], 128, 128, 8
    $region9: #{tpu_custom_call.1} parent=1 // pred_fallthru
      _
    // Predicated region
    $region10: #{tpu_custom_call.1} parent=1 // pred_check
      _
    $region11: #{tpu_custom_call.1} parent=1 // pred_check_branch
      %39 = sbr.rel (0) target = $region13
    $region12: #{tpu_custom_call.1} parent=1 // pred_region
      %s41 = ssub.s32 1024, 1024
      %42 = vsyncadd [#allocation6], %s41
      %s43 = sshll.u32 [#allocation7], 4
      %s44 = int_to_ptr.vmem [resolvable:$true] %s43
      %49 = dma.hbm_to_vmem [thread:$0]  %s2, 1024, %s44, [#allocation6], 128, 128, 8
    $region13: #{tpu_custom_call.1} parent=1 // pred_fallthru
      _
    // Predicated region
    $region14: #{tpu_custom_call.1} parent=1 // pred_check
      _
    $region15: #{tpu_custom_call.1} parent=1 // pred_check_branch
      %51 = sbr.rel (0) target = $region17
    $region16: #{tpu_custom_call.1} parent=1 // pred_region
      %52 = dma.done [#allocation3], 1024
    $region17: #{tpu_custom_call.1} parent=1 // pred_fallthru
      _
    // Predicated region
    $region18: #{tpu_custom_call.1} parent=1 // pred_check
      _
    $region19: #{tpu_custom_call.1} parent=1 // pred_check_branch
      %54 = sbr.rel (0) target = $region21
    $region20: #{tpu_custom_call.1} parent=1 // pred_region
      %55 = dma.done [#allocation6], 1024
    $region21: #{tpu_custom_call.1} parent=1 // pred_fallthru
      _
    // Predicated region
    $region22: #{tpu_custom_call.1} parent=1 // pred_check
      _
    $region23: #{tpu_custom_call.1} parent=1 // pred_check_branch
      %57 = sbr.rel (0) target = $region25
    $region24: #{tpu_custom_call.1} parent=1 // pred_region
      %58 = dma.done [#allocation6], 1024
    $region25: #{tpu_custom_call.1} parent=1 // pred_fallthru
      _
    %v59 = vld [vmem:[#allocation2] sm:$0xff]
    %v60 = vld [vmem:[#allocation2 + $0x8] sm:$0xff]
    %v61 = vld [vmem:[#allocation2 + $0x10] sm:$0xff]
    %v62 = vld [vmem:[#allocation2 + $0x18] sm:$0xff]
    %v63 = vld [vmem:[#allocation2 + $0x20] sm:$0xff]
    %v64 = vld [vmem:[#allocation2 + $0x28] sm:$0xff]
    %v65 = vld [vmem:[#allocation2 + $0x30] sm:$0xff]
    %v66 = vld [vmem:[#allocation2 + $0x38] sm:$0xff]
    %v67 = vld [vmem:[#allocation5] sm:$0xff]
    %v68 = vld [vmem:[#allocation5 + $0x8] sm:$0xff]
    %v69 = vld [vmem:[#allocation5 + $0x10] sm:$0xff]
    %v70 = vld [vmem:[#allocation5 + $0x18] sm:$0xff]
    %v71 = vld [vmem:[#allocation5 + $0x20] sm:$0xff]
    %v72 = vld [vmem:[#allocation5 + $0x28] sm:$0xff]
    %v73 = vld [vmem:[#allocation5 + $0x30] sm:$0xff]
    %v74 = vld [vmem:[#allocation5 + $0x38] sm:$0xff]
    %vm75 = vcmask 261120
    %v77 = vsel %vm75, %v59, 0
    %v80 = vsel %vm75, %v67, 0
    %82 = vmatprep.subr.mxu0 0.0
    %83 = vmatpush1.xpose.msra.mxu0 %v80
    %84 = vmatprep.subr.mxu0 0.0
    %85 = vmatpush1.xpose.msra.mxu0 0.0
    %86 = vmatprep.subr.mxu0 0.0
    %87 = vmatpush1.xpose.msra.mxu0 0.0
    %88 = vmatprep.subr.mxu0 0.0
    %89 = vmatpush1.xpose.msra.mxu0 0.0
    %90 = vmatprep.subr.mxu0 0.0
    %91 = vmatpush1.xpose.msra.mxu0 0.0
    %92 = vmatprep.subr.mxu0 0.0
    %93 = vmatpush1.xpose.msra.mxu0 0.0
    %94 = vmatprep.subr.mxu0 0.0
    %95 = vmatpush1.xpose.msra.mxu0 0.0
    %96 = vmatprep.subr.mxu0 0.0
    %97 = vmatpush1.xpose.msra.mxu0 0.0
    %98 = vmatprep.subr.mxu0 0.0
    %99 = vmatpush1.xpose.msra.mxu0 0.0
    %100 = vmatprep.subr.mxu0 0.0
    %101 = vmatpush1.xpose.msra.mxu0 0.0
    %102 = vmatprep.subr.mxu0 0.0
    %103 = vmatpush1.xpose.msra.mxu0 0.0
    %104 = vmatprep.subr.mxu0 0.0
    %105 = vmatpush1.xpose.msra.mxu0 0.0
    %106 = vmatprep.subr.mxu0 0.0
    %107 = vmatpush1.xpose.msra.mxu0 0.0
    %108 = vmatprep.subr.mxu0 0.0
    %109 = vmatpush1.xpose.msra.mxu0 0.0
    %110 = vmatprep.subr.mxu0 0.0
    %111 = vmatpush1.xpose.msra.mxu0 0.0
    %112 = vmatprep.subr.mxu0 0.0
    %113 = vmatpush1.xpose.msra.mxu0 0.0
    %114 = vmatprep.subr.mxu0 0.0
    %115 = vmatpush1.xpose.msra.mxu0 0.0
    %116 = vmatprep.subr.mxu0 0.0
    %117 = vmatpush1.xpose.msra.mxu0 0.0
    %118 = vmatprep.subr.mxu0 0.0
    %119 = vmatpush1.xpose.msra.mxu0 0.0
    %120 = vmatprep.subr.mxu0 0.0
    %121 = vmatpush1.xpose.msra.mxu0 0.0
    %122 = vmatprep.subr.mxu0 0.0
    %123 = vmatpush1.xpose.msra.mxu0 0.0
    %124 = vmatprep.subr.mxu0 0.0
    %125 = vmatpush1.xpose.msra.mxu0 0.0
    %126 = vmatprep.subr.mxu0 0.0
    %127 = vmatpush1.xpose.msra.mxu0 0.0
    %128 = vmatprep.subr.mxu0 0.0
    %129 = vmatpush1.xpose.msra.mxu0 0.0
    %130 = vmatprep.subr.mxu0 0.0
    %131 = vmatpush1.xpose.msra.mxu0 0.0
    %132 = vmatprep.subr.mxu0 0.0
    %133 = vmatpush1.xpose.msra.mxu0 0.0
    %134 = vmatprep.subr.mxu0 0.0
    %135 = vmatpush1.xpose.msra.mxu0 0.0
    %136 = vmatprep.subr.mxu0 0.0
    %137 = vmatpush1.xpose.msra.mxu0 0.0
    %138 = vmatprep.subr.mxu0 0.0
    %139 = vmatpush1.xpose.msra.mxu0 0.0
    %140 = vmatprep.subr.mxu0 0.0
    %141 = vmatpush1.xpose.msra.mxu0 0.0
    %142 = vmatprep.subr.mxu0 0.0
    %143 = vmatpush1.xpose.msra.mxu0 0.0
    %144 = vmatprep.subr.mxu0 0.0
    %145 = vmatpush1.xpose.msra.mxu0 0.0
    %146 = vmatprep.mubr.f32.mxu0 0.0
    %147 = vmatmul.mubr.f32.gmra.mrb[0].mxu0 %v77
    %v148 = vpop.f32.mrb[0].mxu0
    %v149 = vadd.f32 0.0, %v148
    %v150 = vpop.f32.mrb[0].mxu0
    %151 = vdwg.mxu0
    %v153 = vsel %vm75, %v60, 0
    %v156 = vsel %vm75, %v68, 0
    %158 = vmatprep.subr.mxu0 0.0
    %159 = vmatpush1.xpose.msra.mxu0 %v156
    %160 = vmatprep.subr.mxu0 0.0
    %161 = vmatpush1.xpose.msra.mxu0 0.0
    %162 = vmatprep.subr.mxu0 0.0
    %163 = vmatpush1.xpose.msra.mxu0 0.0
    %164 = vmatprep.subr.mxu0 0.0
    %165 = vmatpush1.xpose.msra.mxu0 0.0
    %166 = vmatprep.subr.mxu0 0.0
    %167 = vmatpush1.xpose.msra.mxu0 0.0
    %168 = vmatprep.subr.mxu0 0.0
    %169 = vmatpush1.xpose.msra.mxu0 0.0
    %170 = vmatprep.subr.mxu0 0.0
    %171 = vmatpush1.xpose.msra.mxu0 0.0
    %172 = vmatprep.subr.mxu0 0.0
    %173 = vmatpush1.xpose.msra.mxu0 0.0
    %174 = vmatprep.subr.mxu0 0.0
    %175 = vmatpush1.xpose.msra.mxu0 0.0
    %176 = vmatprep.subr.mxu0 0.0
    %177 = vmatpush1.xpose.msra.mxu0 0.0
    %178 = vmatprep.subr.mxu0 0.0
    %179 = vmatpush1.xpose.msra.mxu0 0.0
    %180 = vmatprep.subr.mxu0 0.0
    %181 = vmatpush1.xpose.msra.mxu0 0.0
    %182 = vmatprep.subr.mxu0 0.0
    %183 = vmatpush1.xpose.msra.mxu0 0.0
    %184 = vmatprep.subr.mxu0 0.0
    %185 = vmatpush1.xpose.msra.mxu0 0.0
    %186 = vmatprep.subr.mxu0 0.0
    %187 = vmatpush1.xpose.msra.mxu0 0.0
    %188 = vmatprep.subr.mxu0 0.0
    %189 = vmatpush1.xpose.msra.mxu0 0.0
    %190 = vmatprep.subr.mxu0 0.0
    %191 = vmatpush1.xpose.msra.mxu0 0.0
    %192 = vmatprep.subr.mxu0 0.0
    %193 = vmatpush1.xpose.msra.mxu0 0.0
    %194 = vmatprep.subr.mxu0 0.0
    %195 = vmatpush1.xpose.msra.mxu0 0.0
    %196 = vmatprep.subr.mxu0 0.0
    %197 = vmatpush1.xpose.msra.mxu0 0.0
    %198 = vmatprep.subr.mxu0 0.0
    %199 = vmatpush1.xpose.msra.mxu0 0.0
    %200 = vmatprep.subr.mxu0 0.0
    %201 = vmatpush1.xpose.msra.mxu0 0.0
    %202 = vmatprep.subr.mxu0 0.0
    %203 = vmatpush1.xpose.msra.mxu0 0.0
    %204 = vmatprep.subr.mxu0 0.0
    %205 = vmatpush1.xpose.msra.mxu0 0.0
    %206 = vmatprep.subr.mxu0 0.0
    %207 = vmatpush1.xpose.msra.mxu0 0.0
    %208 = vmatprep.subr.mxu0 0.0
    %209 = vmatpush1.xpose.msra.mxu0 0.0
    %210 = vmatprep.subr.mxu0 0.0
    %211 = vmatpush1.xpose.msra.mxu0 0.0
    %212 = vmatprep.subr.mxu0 0.0
    %213 = vmatpush1.xpose.msra.mxu0 0.0
    %214 = vmatprep.subr.mxu0 0.0
    %215 = vmatpush1.xpose.msra.mxu0 0.0
    %216 = vmatprep.subr.mxu0 0.0
    %217 = vmatpush1.xpose.msra.mxu0 0.0
    %218 = vmatprep.subr.mxu0 0.0
    %219 = vmatpush1.xpose.msra.mxu0 0.0
    %220 = vmatprep.subr.mxu0 0.0
    %221 = vmatpush1.xpose.msra.mxu0 0.0
    %222 = vmatprep.mubr.f32.mxu0 0.0
    %223 = vmatmul.mubr.f32.gmra.mrb[0].mxu0 %v153
    %v224 = vpop.f32.mrb[0].mxu0
    %v225 = vadd.f32 0.0, %v224
    %v226 = vpop.f32.mrb[0].mxu0
    %227 = vdwg.mxu0
    %v229 = vsel %vm75, %v61, 0
    %v232 = vsel %vm75, %v69, 0
    %234 = vmatprep.subr.mxu0 0.0
    %235 = vmatpush1.xpose.msra.mxu0 %v232
    %236 = vmatprep.subr.mxu0 0.0
    %237 = vmatpush1.xpose.msra.mxu0 0.0
    %238 = vmatprep.subr.mxu0 0.0
    %239 = vmatpush1.xpose.msra.mxu0 0.0
    %240 = vmatprep.subr.mxu0 0.0
    %241 = vmatpush1.xpose.msra.mxu0 0.0
    %242 = vmatprep.subr.mxu0 0.0
    %243 = vmatpush1.xpose.msra.mxu0 0.0
    %244 = vmatprep.subr.mxu0 0.0
    %245 = vmatpush1.xpose.msra.mxu0 0.0
    %246 = vmatprep.subr.mxu0 0.0
    %247 = vmatpush1.xpose.msra.mxu0 0.0
    %248 = vmatprep.subr.mxu0 0.0
    %249 = vmatpush1.xpose.msra.mxu0 0.0
    %250 = vmatprep.subr.mxu0 0.0
    %251 = vmatpush1.xpose.msra.mxu0 0.0
    %252 = vmatprep.subr.mxu0 0.0
    %253 = vmatpush1.xpose.msra.mxu0 0.0
    %254 = vmatprep.subr.mxu0 0.0
    %255 = vmatpush1.xpose.msra.mxu0 0.0
    %256 = vmatprep.subr.mxu0 0.0
    %257 = vmatpush1.xpose.msra.mxu0 0.0
    %258 = vmatprep.subr.mxu0 0.0
    %259 = vmatpush1.xpose.msra.mxu0 0.0
    %260 = vmatprep.subr.mxu0 0.0
    %261 = vmatpush1.xpose.msra.mxu0 0.0
    %262 = vmatprep.subr.mxu0 0.0
    %263 = vmatpush1.xpose.msra.mxu0 0.0
    %264 = vmatprep.subr.mxu0 0.0
    %265 = vmatpush1.xpose.msra.mxu0 0.0
    %266 = vmatprep.subr.mxu0 0.0
    %267 = vmatpush1.xpose.msra.mxu0 0.0
    %268 = vmatprep.subr.mxu0 0.0
    %269 = vmatpush1.xpose.msra.mxu0 0.0
    %270 = vmatprep.subr.mxu0 0.0
    %271 = vmatpush1.xpose.msra.mxu0 0.0
    %272 = vmatprep.subr.mxu0 0.0
    %273 = vmatpush1.xpose.msra.mxu0 0.0
    %274 = vmatprep.subr.mxu0 0.0
    %275 = vmatpush1.xpose.msra.mxu0 0.0
    %276 = vmatprep.subr.mxu0 0.0
    %277 = vmatpush1.xpose.msra.mxu0 0.0
    %278 = vmatprep.subr.mxu0 0.0
    %279 = vmatpush1.xpose.msra.mxu0 0.0
    %280 = vmatprep.subr.mxu0 0.0
    %281 = vmatpush1.xpose.msra.mxu0 0.0
    %282 = vmatprep.subr.mxu0 0.0
    %283 = vmatpush1.xpose.msra.mxu0 0.0
    %284 = vmatprep.subr.mxu0 0.0
    %285 = vmatpush1.xpose.msra.mxu0 0.0
    %286 = vmatprep.subr.mxu0 0.0
    %287 = vmatpush1.xpose.msra.mxu0 0.0
    %288 = vmatprep.subr.mxu0 0.0
    %289 = vmatpush1.xpose.msra.mxu0 0.0
    %290 = vmatprep.subr.mxu0 0.0
    %291 = vmatpush1.xpose.msra.mxu0 0.0
    %292 = vmatprep.subr.mxu0 0.0
    %293 = vmatpush1.xpose.msra.mxu0 0.0
    %294 = vmatprep.subr.mxu0 0.0
    %295 = vmatpush1.xpose.msra.mxu0 0.0
    %296 = vmatprep.subr.mxu0 0.0
    %297 = vmatpush1.xpose.msra.mxu0 0.0
    %298 = vmatprep.mubr.f32.mxu0 0.0
    %299 = vmatmul.mubr.f32.gmra.mrb[0].mxu0 %v229
    %v300 = vpop.f32.mrb[0].mxu0
    %v301 = vadd.f32 0.0, %v300
    %v302 = vpop.f32.mrb[0].mxu0
    %303 = vdwg.mxu0
    %v305 = vsel %vm75, %v62, 0
    %v308 = vsel %vm75, %v70, 0
    %310 = vmatprep.subr.mxu0 0.0
    %311 = vmatpush1.xpose.msra.mxu0 %v308
    %312 = vmatprep.subr.mxu0 0.0
    %313 = vmatpush1.xpose.msra.mxu0 0.0
    %314 = vmatprep.subr.mxu0 0.0
    %315 = vmatpush1.xpose.msra.mxu0 0.0
    %316 = vmatprep.subr.mxu0 0.0
    %317 = vmatpush1.xpose.msra.mxu0 0.0
    %318 = vmatprep.subr.mxu0 0.0
    %319 = vmatpush1.xpose.msra.mxu0 0.0
    %320 = vmatprep.subr.mxu0 0.0
    %321 = vmatpush1.xpose.msra.mxu0 0.0
    %322 = vmatprep.subr.mxu0 0.0
    %323 = vmatpush1.xpose.msra.mxu0 0.0
    %324 = vmatprep.subr.mxu0 0.0
    %325 = vmatpush1.xpose.msra.mxu0 0.0
    %326 = vmatprep.subr.mxu0 0.0
    %327 = vmatpush1.xpose.msra.mxu0 0.0
    %328 = vmatprep.subr.mxu0 0.0
    %329 = vmatpush1.xpose.msra.mxu0 0.0
    %330 = vmatprep.subr.mxu0 0.0
    %331 = vmatpush1.xpose.msra.mxu0 0.0
    %332 = vmatprep.subr.mxu0 0.0
    %333 = vmatpush1.xpose.msra.mxu0 0.0
    %334 = vmatprep.subr.mxu0 0.0
    %335 = vmatpush1.xpose.msra.mxu0 0.0
    %336 = vmatprep.subr.mxu0 0.0
    %337 = vmatpush1.xpose.msra.mxu0 0.0
    %338 = vmatprep.subr.mxu0 0.0
    %339 = vmatpush1.xpose.msra.mxu0 0.0
    %340 = vmatprep.subr.mxu0 0.0
    %341 = vmatpush1.xpose.msra.mxu0 0.0
    %342 = vmatprep.subr.mxu0 0.0
    %343 = vmatpush1.xpose.msra.mxu0 0.0
    %344 = vmatprep.subr.mxu0 0.0
    %345 = vmatpush1.xpose.msra.mxu0 0.0
    %346 = vmatprep.subr.mxu0 0.0
    %347 = vmatpush1.xpose.msra.mxu0 0.0
    %348 = vmatprep.subr.mxu0 0.0
    %349 = vmatpush1.xpose.msra.mxu0 0.0
    %350 = vmatprep.subr.mxu0 0.0
    %351 = vmatpush1.xpose.msra.mxu0 0.0
    %352 = vmatprep.subr.mxu0 0.0
    %353 = vmatpush1.xpose.msra.mxu0 0.0
    %354 = vmatprep.subr.mxu0 0.0
    %355 = vmatpush1.xpose.msra.mxu0 0.0
    %356 = vmatprep.subr.mxu0 0.0
    %357 = vmatpush1.xpose.msra.mxu0 0.0
    %358 = vmatprep.subr.mxu0 0.0
    %359 = vmatpush1.xpose.msra.mxu0 0.0
    %360 = vmatprep.subr.mxu0 0.0
    %361 = vmatpush1.xpose.msra.mxu0 0.0
    %362 = vmatprep.subr.mxu0 0.0
    %363 = vmatpush1.xpose.msra.mxu0 0.0
    %364 = vmatprep.subr.mxu0 0.0
    %365 = vmatpush1.xpose.msra.mxu0 0.0
    %366 = vmatprep.subr.mxu0 0.0
    %367 = vmatpush1.xpose.msra.mxu0 0.0
    %368 = vmatprep.subr.mxu0 0.0
    %369 = vmatpush1.xpose.msra.mxu0 0.0
    %370 = vmatprep.subr.mxu0 0.0
    %371 = vmatpush1.xpose.msra.mxu0 0.0
    %372 = vmatprep.subr.mxu0 0.0
    %373 = vmatpush1.xpose.msra.mxu0 0.0
    %374 = vmatprep.mubr.f32.mxu0 0.0
    %375 = vmatmul.mubr.f32.gmra.mrb[0].mxu0 %v305
    %v376 = vpop.f32.mrb[0].mxu0
    %v377 = vadd.f32 0.0, %v376
    %v378 = vpop.f32.mrb[0].mxu0
    %379 = vdwg.mxu0
    %v381 = vsel %vm75, %v63, 0
    %v384 = vsel %vm75, %v71, 0
    %386 = vmatprep.subr.mxu0 0.0
    %387 = vmatpush1.xpose.msra.mxu0 %v384
    %388 = vmatprep.subr.mxu0 0.0
    %389 = vmatpush1.xpose.msra.mxu0 0.0
    %390 = vmatprep.subr.mxu0 0.0
    %391 = vmatpush1.xpose.msra.mxu0 0.0
    %392 = vmatprep.subr.mxu0 0.0
    %393 = vmatpush1.xpose.msra.mxu0 0.0
    %394 = vmatprep.subr.mxu0 0.0
    %395 = vmatpush1.xpose.msra.mxu0 0.0
    %396 = vmatprep.subr.mxu0 0.0
    %397 = vmatpush1.xpose.msra.mxu0 0.0
    %398 = vmatprep.subr.mxu0 0.0
    %399 = vmatpush1.xpose.msra.mxu0 0.0
    %400 = vmatprep.subr.mxu0 0.0
    %401 = vmatpush1.xpose.msra.mxu0 0.0
    %402 = vmatprep.subr.mxu0 0.0
    %403 = vmatpush1.xpose.msra.mxu0 0.0
    %404 = vmatprep.subr.mxu0 0.0
    %405 = vmatpush1.xpose.msra.mxu0 0.0
    %406 = vmatprep.subr.mxu0 0.0
    %407 = vmatpush1.xpose.msra.mxu0 0.0
    %408 = vmatprep.subr.mxu0 0.0
    %409 = vmatpush1.xpose.msra.mxu0 0.0
    %410 = vmatprep.subr.mxu0 0.0
    %411 = vmatpush1.xpose.msra.mxu0 0.0
    %412 = vmatprep.subr.mxu0 0.0
    %413 = vmatpush1.xpose.msra.mxu0 0.0
    %414 = vmatprep.subr.mxu0 0.0
    %415 = vmatpush1.xpose.msra.mxu0 0.0
    %416 = vmatprep.subr.mxu0 0.0
    %417 = vmatpush1.xpose.msra.mxu0 0.0
    %418 = vmatprep.subr.mxu0 0.0
    %419 = vmatpush1.xpose.msra.mxu0 0.0
    %420 = vmatprep.subr.mxu0 0.0
    %421 = vmatpush1.xpose.msra.mxu0 0.0
    %422 = vmatprep.subr.mxu0 0.0
    %423 = vmatpush1.xpose.msra.mxu0 0.0
    %424 = vmatprep.subr.mxu0 0.0
    %425 = vmatpush1.xpose.msra.mxu0 0.0
    %426 = vmatprep.subr.mxu0 0.0
    %427 = vmatpush1.xpose.msra.mxu0 0.0
    %428 = vmatprep.subr.mxu0 0.0
    %429 = vmatpush1.xpose.msra.mxu0 0.0
    %430 = vmatprep.subr.mxu0 0.0
    %431 = vmatpush1.xpose.msra.mxu0 0.0
    %432 = vmatprep.subr.mxu0 0.0
    %433 = vmatpush1.xpose.msra.mxu0 0.0
    %434 = vmatprep.subr.mxu0 0.0
    %435 = vmatpush1.xpose.msra.mxu0 0.0
    %436 = vmatprep.subr.mxu0 0.0
    %437 = vmatpush1.xpose.msra.mxu0 0.0
    %438 = vmatprep.subr.mxu0 0.0
    %439 = vmatpush1.xpose.msra.mxu0 0.0
    %440 = vmatprep.subr.mxu0 0.0
    %441 = vmatpush1.xpose.msra.mxu0 0.0
    %442 = vmatprep.subr.mxu0 0.0
    %443 = vmatpush1.xpose.msra.mxu0 0.0
    %444 = vmatprep.subr.mxu0 0.0
    %445 = vmatpush1.xpose.msra.mxu0 0.0
    %446 = vmatprep.subr.mxu0 0.0
    %447 = vmatpush1.xpose.msra.mxu0 0.0
    %448 = vmatprep.subr.mxu0 0.0
    %449 = vmatpush1.xpose.msra.mxu0 0.0
    %450 = vmatprep.mubr.f32.mxu0 0.0
    %451 = vmatmul.mubr.f32.gmra.mrb[0].mxu0 %v381
    %v452 = vpop.f32.mrb[0].mxu0
    %v453 = vadd.f32 0.0, %v452
    %v454 = vpop.f32.mrb[0].mxu0
    %455 = vdwg.mxu0
    %v457 = vsel %vm75, %v64, 0
    %v460 = vsel %vm75, %v72, 0
    %462 = vmatprep.subr.mxu0 0.0
    %463 = vmatpush1.xpose.msra.mxu0 %v460
    %464 = vmatprep.subr.mxu0 0.0
    %465 = vmatpush1.xpose.msra.mxu0 0.0
    %466 = vmatprep.subr.mxu0 0.0
    %467 = vmatpush1.xpose.msra.mxu0 0.0
    %468 = vmatprep.subr.mxu0 0.0
    %469 = vmatpush1.xpose.msra.mxu0 0.0
    %470 = vmatprep.subr.mxu0 0.0
    %471 = vmatpush1.xpose.msra.mxu0 0.0
    %472 = vmatprep.subr.mxu0 0.0
    %473 = vmatpush1.xpose.msra.mxu0 0.0
    %474 = vmatprep.subr.mxu0 0.0
    %475 = vmatpush1.xpose.msra.mxu0 0.0
    %476 = vmatprep.subr.mxu0 0.0
    %477 = vmatpush1.xpose.msra.mxu0 0.0
    %478 = vmatprep.subr.mxu0 0.0
    %479 = vmatpush1.xpose.msra.mxu0 0.0
    %480 = vmatprep.subr.mxu0 0.0
    %481 = vmatpush1.xpose.msra.mxu0 0.0
    %482 = vmatprep.subr.mxu0 0.0
    %483 = vmatpush1.xpose.msra.mxu0 0.0
    %484 = vmatprep.subr.mxu0 0.0
    %485 = vmatpush1.xpose.msra.mxu0 0.0
    %486 = vmatprep.subr.mxu0 0.0
    %487 = vmatpush1.xpose.msra.mxu0 0.0
    %488 = vmatprep.subr.mxu0 0.0
    %489 = vmatpush1.xpose.msra.mxu0 0.0
    %490 = vmatprep.subr.mxu0 0.0
    %491 = vmatpush1.xpose.msra.mxu0 0.0
    %492 = vmatprep.subr.mxu0 0.0
    %493 = vmatpush1.xpose.msra.mxu0 0.0
    %494 = vmatprep.subr.mxu0 0.0
    %495 = vmatpush1.xpose.msra.mxu0 0.0
    %496 = vmatprep.subr.mxu0 0.0
    %497 = vmatpush1.xpose.msra.mxu0 0.0
    %498 = vmatprep.subr.mxu0 0.0
    %499 = vmatpush1.xpose.msra.mxu0 0.0
    %500 = vmatprep.subr.mxu0 0.0
    %501 = vmatpush1.xpose.msra.mxu0 0.0
    %502 = vmatprep.subr.mxu0 0.0
    %503 = vmatpush1.xpose.msra.mxu0 0.0
    %504 = vmatprep.subr.mxu0 0.0
    %505 = vmatpush1.xpose.msra.mxu0 0.0
    %506 = vmatprep.subr.mxu0 0.0
    %507 = vmatpush1.xpose.msra.mxu0 0.0
    %508 = vmatprep.subr.mxu0 0.0
    %509 = vmatpush1.xpose.msra.mxu0 0.0
    %510 = vmatprep.subr.mxu0 0.0
    %511 = vmatpush1.xpose.msra.mxu0 0.0
    %512 = vmatprep.subr.mxu0 0.0
    %513 = vmatpush1.xpose.msra.mxu0 0.0
    %514 = vmatprep.subr.mxu0 0.0
    %515 = vmatpush1.xpose.msra.mxu0 0.0
    %516 = vmatprep.subr.mxu0 0.0
    %517 = vmatpush1.xpose.msra.mxu0 0.0
    %518 = vmatprep.subr.mxu0 0.0
    %519 = vmatpush1.xpose.msra.mxu0 0.0
    %520 = vmatprep.subr.mxu0 0.0
    %521 = vmatpush1.xpose.msra.mxu0 0.0
    %522 = vmatprep.subr.mxu0 0.0
    %523 = vmatpush1.xpose.msra.mxu0 0.0
    %524 = vmatprep.subr.mxu0 0.0
    %525 = vmatpush1.xpose.msra.mxu0 0.0
    %526 = vmatprep.mubr.f32.mxu0 0.0
    %527 = vmatmul.mubr.f32.gmra.mrb[0].mxu0 %v457
    %v528 = vpop.f32.mrb[0].mxu0
    %v529 = vadd.f32 0.0, %v528
    %v530 = vpop.f32.mrb[0].mxu0
    %531 = vdwg.mxu0
    %v533 = vsel %vm75, %v65, 0
    %v536 = vsel %vm75, %v73, 0
    %538 = vmatprep.subr.mxu0 0.0
    %539 = vmatpush1.xpose.msra.mxu0 %v536
    %540 = vmatprep.subr.mxu0 0.0
    %541 = vmatpush1.xpose.msra.mxu0 0.0
    %542 = vmatprep.subr.mxu0 0.0
    %543 = vmatpush1.xpose.msra.mxu0 0.0
    %544 = vmatprep.subr.mxu0 0.0
    %545 = vmatpush1.xpose.msra.mxu0 0.0
    %546 = vmatprep.subr.mxu0 0.0
    %547 = vmatpush1.xpose.msra.mxu0 0.0
    %548 = vmatprep.subr.mxu0 0.0
    %549 = vmatpush1.xpose.msra.mxu0 0.0
    %550 = vmatprep.subr.mxu0 0.0
    %551 = vmatpush1.xpose.msra.mxu0 0.0
    %552 = vmatprep.subr.mxu0 0.0
    %553 = vmatpush1.xpose.msra.mxu0 0.0
    %554 = vmatprep.subr.mxu0 0.0
    %555 = vmatpush1.xpose.msra.mxu0 0.0
    %556 = vmatprep.subr.mxu0 0.0
    %557 = vmatpush1.xpose.msra.mxu0 0.0
    %558 = vmatprep.subr.mxu0 0.0
    %559 = vmatpush1.xpose.msra.mxu0 0.0
    %560 = vmatprep.subr.mxu0 0.0
    %561 = vmatpush1.xpose.msra.mxu0 0.0
    %562 = vmatprep.subr.mxu0 0.0
    %563 = vmatpush1.xpose.msra.mxu0 0.0
    %564 = vmatprep.subr.mxu0 0.0
    %565 = vmatpush1.xpose.msra.mxu0 0.0
    %566 = vmatprep.subr.mxu0 0.0
    %567 = vmatpush1.xpose.msra.mxu0 0.0
    %568 = vmatprep.subr.mxu0 0.0
    %569 = vmatpush1.xpose.msra.mxu0 0.0
    %570 = vmatprep.subr.mxu0 0.0
    %571 = vmatpush1.xpose.msra.mxu0 0.0
    %572 = vmatprep.subr.mxu0 0.0
    %573 = vmatpush1.xpose.msra.mxu0 0.0
    %574 = vmatprep.subr.mxu0 0.0
    %575 = vmatpush1.xpose.msra.mxu0 0.0
    %576 = vmatprep.subr.mxu0 0.0
    %577 = vmatpush1.xpose.msra.mxu0 0.0
    %578 = vmatprep.subr.mxu0 0.0
    %579 = vmatpush1.xpose.msra.mxu0 0.0
    %580 = vmatprep.subr.mxu0 0.0
    %581 = vmatpush1.xpose.msra.mxu0 0.0
    %582 = vmatprep.subr.mxu0 0.0
    %583 = vmatpush1.xpose.msra.mxu0 0.0
    %584 = vmatprep.subr.mxu0 0.0
    %585 = vmatpush1.xpose.msra.mxu0 0.0
    %586 = vmatprep.subr.mxu0 0.0
    %587 = vmatpush1.xpose.msra.mxu0 0.0
    %588 = vmatprep.subr.mxu0 0.0
    %589 = vmatpush1.xpose.msra.mxu0 0.0
    %590 = vmatprep.subr.mxu0 0.0
    %591 = vmatpush1.xpose.msra.mxu0 0.0
    %592 = vmatprep.subr.mxu0 0.0
    %593 = vmatpush1.xpose.msra.mxu0 0.0
    %594 = vmatprep.subr.mxu0 0.0
    %595 = vmatpush1.xpose.msra.mxu0 0.0
    %596 = vmatprep.subr.mxu0 0.0
    %597 = vmatpush1.xpose.msra.mxu0 0.0
    %598 = vmatprep.subr.mxu0 0.0
    %599 = vmatpush1.xpose.msra.mxu0 0.0
    %600 = vmatprep.subr.mxu0 0.0
    %601 = vmatpush1.xpose.msra.mxu0 0.0
    %602 = vmatprep.mubr.f32.mxu0 0.0
    %603 = vmatmul.mubr.f32.gmra.mrb[0].mxu0 %v533
    %v604 = vpop.f32.mrb[0].mxu0
    %v605 = vadd.f32 0.0, %v604
    %v606 = vpop.f32.mrb[0].mxu0
    %607 = vdwg.mxu0
    %v609 = vsel %vm75, %v66, 0
    %v612 = vsel %vm75, %v74, 0
    %614 = vmatprep.subr.mxu0 0.0
    %615 = vmatpush1.xpose.msra.mxu0 %v612
    %616 = vmatprep.subr.mxu0 0.0
    %617 = vmatpush1.xpose.msra.mxu0 0.0
    %618 = vmatprep.subr.mxu0 0.0
    %619 = vmatpush1.xpose.msra.mxu0 0.0
    %620 = vmatprep.subr.mxu0 0.0
    %621 = vmatpush1.xpose.msra.mxu0 0.0
    %622 = vmatprep.subr.mxu0 0.0
    %623 = vmatpush1.xpose.msra.mxu0 0.0
    %624 = vmatprep.subr.mxu0 0.0
    %625 = vmatpush1.xpose.msra.mxu0 0.0
    %626 = vmatprep.subr.mxu0 0.0
    %627 = vmatpush1.xpose.msra.mxu0 0.0
    %628 = vmatprep.subr.mxu0 0.0
    %629 = vmatpush1.xpose.msra.mxu0 0.0
    %630 = vmatprep.subr.mxu0 0.0
    %631 = vmatpush1.xpose.msra.mxu0 0.0
    %632 = vmatprep.subr.mxu0 0.0
    %633 = vmatpush1.xpose.msra.mxu0 0.0
    %634 = vmatprep.subr.mxu0 0.0
    %635 = vmatpush1.xpose.msra.mxu0 0.0
    %636 = vmatprep.subr.mxu0 0.0
    %637 = vmatpush1.xpose.msra.mxu0 0.0
    %638 = vmatprep.subr.mxu0 0.0
    %639 = vmatpush1.xpose.msra.mxu0 0.0
    %640 = vmatprep.subr.mxu0 0.0
    %641 = vmatpush1.xpose.msra.mxu0 0.0
    %642 = vmatprep.subr.mxu0 0.0
    %643 = vmatpush1.xpose.msra.mxu0 0.0
    %644 = vmatprep.subr.mxu0 0.0
    %645 = vmatpush1.xpose.msra.mxu0 0.0
    %646 = vmatprep.subr.mxu0 0.0
    %647 = vmatpush1.xpose.msra.mxu0 0.0
    %648 = vmatprep.subr.mxu0 0.0
    %649 = vmatpush1.xpose.msra.mxu0 0.0
    %650 = vmatprep.subr.mxu0 0.0
    %651 = vmatpush1.xpose.msra.mxu0 0.0
    %652 = vmatprep.subr.mxu0 0.0
    %653 = vmatpush1.xpose.msra.mxu0 0.0
    %654 = vmatprep.subr.mxu0 0.0
    %655 = vmatpush1.xpose.msra.mxu0 0.0
    %656 = vmatprep.subr.mxu0 0.0
    %657 = vmatpush1.xpose.msra.mxu0 0.0
    %658 = vmatprep.subr.mxu0 0.0
    %659 = vmatpush1.xpose.msra.mxu0 0.0
    %660 = vmatprep.subr.mxu0 0.0
    %661 = vmatpush1.xpose.msra.mxu0 0.0
    %662 = vmatprep.subr.mxu0 0.0
    %663 = vmatpush1.xpose.msra.mxu0 0.0
    %664 = vmatprep.subr.mxu0 0.0
    %665 = vmatpush1.xpose.msra.mxu0 0.0
    %666 = vmatprep.subr.mxu0 0.0
    %667 = vmatpush1.xpose.msra.mxu0 0.0
    %668 = vmatprep.subr.mxu0 0.0
    %669 = vmatpush1.xpose.msra.mxu0 0.0
    %670 = vmatprep.subr.mxu0 0.0
    %671 = vmatpush1.xpose.msra.mxu0 0.0
    %672 = vmatprep.subr.mxu0 0.0
    %673 = vmatpush1.xpose.msra.mxu0 0.0
    %674 = vmatprep.subr.mxu0 0.0
    %675 = vmatpush1.xpose.msra.mxu0 0.0
    %676 = vmatprep.subr.mxu0 0.0
    %677 = vmatpush1.xpose.msra.mxu0 0.0
    %678 = vmatprep.mubr.f32.mxu0 0.0
    %679 = vmatmul.mubr.f32.gmra.mrb[0].mxu0 %v609
    %v680 = vpop.f32.mrb[0].mxu0
    %v681 = vadd.f32 0.0, %v680
    %v682 = vpop.f32.mrb[0].mxu0
    %683 = vdwg.mxu0
    %v684 = vmul.f32 %v149, 0.17677669
    %v685 = vmul.f32 %v225, 0.17677669
    %v686 = vmul.f32 %v301, 0.17677669
    %v687 = vmul.f32 %v377, 0.17677669
    %v688 = vmul.f32 %v453, 0.17677669
    %v689 = vmul.f32 %v529, 0.17677669
    %v690 = vmul.f32 %v605, 0.17677669
    %v691 = vmul.f32 %v681, 0.17677669
    %vm692 = vcmask 64512
    %v693 = vsel %vm692, %v684, -inf
    %694 = vmax.xlane.f32.xlu0 %v693
    %v695 = vpop.xlane.xlu0 %694
    %v696 = vsel %vm692, %v685, -inf
    %697 = vmax.xlane.f32.xlu0 %v696
    %v698 = vpop.xlane.xlu0 %697
    %v699 = vsel %vm692, %v686, -inf
    %700 = vmax.xlane.f32.xlu0 %v699
    %v701 = vpop.xlane.xlu0 %700
    %v702 = vsel %vm692, %v687, -inf
    %703 = vmax.xlane.f32.xlu0 %v702
    %v704 = vpop.xlane.xlu0 %703
    %v705 = vsel %vm692, %v688, -inf
    %706 = vmax.xlane.f32.xlu0 %v705
    %v707 = vpop.xlane.xlu0 %706
    %v708 = vsel %vm692, %v689, -inf
    %709 = vmax.xlane.f32.xlu0 %v708
    %v710 = vpop.xlane.xlu0 %709
    %v711 = vsel %vm692, %v690, -inf
    %712 = vmax.xlane.f32.xlu0 %v711
    %v713 = vpop.xlane.xlu0 %712
    %v714 = vsel %vm692, %v691, -inf
    %715 = vmax.xlane.f32.xlu0 %v714
    %v716 = vpop.xlane.xlu0 %715
    %v717 = vsub.f32 %v684, %v695
    %v718 = vsub.f32 %v685, %v698
    %v719 = vsub.f32 %v686, %v701
    %v720 = vsub.f32 %v687, %v704
    %v721 = vsub.f32 %v688, %v707
    %v722 = vsub.f32 %v689, %v710
    %v723 = vsub.f32 %v690, %v713
    %v724 = vsub.f32 %v691, %v716
    %v725 = vmul.f32 %v717, 1.442695
    %v726 = vpow.pop %v725
    %v727 = vmul.f32 %v718, 1.442695
    %v728 = vpow.pop %v727
    %v729 = vmul.f32 %v719, 1.442695
    %v730 = vpow.pop %v729
    %v731 = vmul.f32 %v720, 1.442695
    %v732 = vpow.pop %v731
    %v733 = vmul.f32 %v721, 1.442695
    %v734 = vpow.pop %v733
    %v735 = vmul.f32 %v722, 1.442695
    %v736 = vpow.pop %v735
    %v737 = vmul.f32 %v723, 1.442695
    %v738 = vpow.pop %v737
    %v739 = vmul.f32 %v724, 1.442695
    %v740 = vpow.pop %v739
    %v741 = vsel %vm692, %v726, 0.0
    %742 = vadd.xlane.f32.xlu0 %v741
    %v743 = vpop.xlane.xlu0 %742
    %v744 = vsel %vm692, %v728, 0.0
    %745 = vadd.xlane.f32.xlu0 %v744
    %v746 = vpop.xlane.xlu0 %745
    %v747 = vsel %vm692, %v730, 0.0
    %748 = vadd.xlane.f32.xlu0 %v747
    %v749 = vpop.xlane.xlu0 %748
    %v750 = vsel %vm692, %v732, 0.0
    %751 = vadd.xlane.f32.xlu0 %v750
    %v752 = vpop.xlane.xlu0 %751
    %v753 = vsel %vm692, %v734, 0.0
    %754 = vadd.xlane.f32.xlu0 %v753
    %v755 = vpop.xlane.xlu0 %754
    %v756 = vsel %vm692, %v736, 0.0
    %757 = vadd.xlane.f32.xlu0 %v756
    %v758 = vpop.xlane.xlu0 %757
    %v759 = vsel %vm692, %v738, 0.0
    %760 = vadd.xlane.f32.xlu0 %v759
    %v761 = vpop.xlane.xlu0 %760
    %v762 = vsel %vm692, %v740, 0.0
    %763 = vadd.xlane.f32.xlu0 %v762
    %v764 = vpop.xlane.xlu0 %763
    %v765 = vrcp.pop %v743
    %v766 = vrcp.pop %v746
    %v767 = vrcp.pop %v749
    %v768 = vrcp.pop %v752
    %v769 = vrcp.pop %v755
    %v770 = vrcp.pop %v758
    %v771 = vrcp.pop %v761
    %v772 = vrcp.pop %v764
    %v773 = vmul.f32 %v726, %v765
    %v774 = vmul.f32 %v728, %v766
    %v775 = vmul.f32 %v730, %v767
    %v776 = vmul.f32 %v732, %v768
    %v777 = vmul.f32 %v734, %v769
    %v778 = vmul.f32 %v736, %v770
    %v779 = vmul.f32 %v738, %v771
    %v780 = vmul.f32 %v740, %v772
    %v781 = vld [vmem:[#allocation7] sm:$0xff]
    %v782 = vld [vmem:[#allocation7 + $0x8] sm:$0xff]
    %v783 = vld [vmem:[#allocation7 + $0x10] sm:$0xff]
    %v784 = vld [vmem:[#allocation7 + $0x18] sm:$0xff]
    %v785 = vld [vmem:[#allocation7 + $0x20] sm:$0xff]
    %v786 = vld [vmem:[#allocation7 + $0x28] sm:$0xff]
    %v787 = vld [vmem:[#allocation7 + $0x30] sm:$0xff]
    %v788 = vld [vmem:[#allocation7 + $0x38] sm:$0xff]
    %v790 = vsel %vm692, %v773, 0
    %792 = vmatprep.subr.mxu0 0.0
    %793 = vmatpush1.msra.mxu0 %v781
    %794 = vmatprep.subr.mxu0 0.0
    %795 = vmatpush1.msra.mxu0 0.0
    %796 = vmatprep.subr.mxu0 0.0
    %797 = vmatpush1.msra.mxu0 0.0
    %798 = vmatprep.subr.mxu0 0.0
    %799 = vmatpush1.msra.mxu0 0.0
    %800 = vmatprep.subr.mxu0 0.0
    %801 = vmatpush1.msra.mxu0 0.0
    %802 = vmatprep.subr.mxu0 0.0
    %803 = vmatpush1.msra.mxu0 0.0
    %804 = vmatprep.subr.mxu0 0.0
    %805 = vmatpush1.msra.mxu0 0.0
    %806 = vmatprep.subr.mxu0 0.0
    %807 = vmatpush1.msra.mxu0 0.0
    %808 = vmatprep.subr.mxu0 0.0
    %809 = vmatpush1.msra.mxu0 0.0
    %810 = vmatprep.subr.mxu0 0.0
    %811 = vmatpush1.msra.mxu0 0.0
    %812 = vmatprep.subr.mxu0 0.0
    %813 = vmatpush1.msra.mxu0 0.0
    %814 = vmatprep.subr.mxu0 0.0
    %815 = vmatpush1.msra.mxu0 0.0
    %816 = vmatprep.subr.mxu0 0.0
    %817 = vmatpush1.msra.mxu0 0.0
    %818 = vmatprep.subr.mxu0 0.0
    %819 = vmatpush1.msra.mxu0 0.0
    %820 = vmatprep.subr.mxu0 0.0
    %821 = vmatpush1.msra.mxu0 0.0
    %822 = vmatprep.subr.mxu0 0.0
    %823 = vmatpush1.msra.mxu0 0.0
    %824 = vmatprep.subr.mxu0 0.0
    %825 = vmatpush1.msra.mxu0 0.0
    %826 = vmatprep.subr.mxu0 0.0
    %827 = vmatpush1.msra.mxu0 0.0
    %828 = vmatprep.subr.mxu0 0.0
    %829 = vmatpush1.msra.mxu0 0.0
    %830 = vmatprep.subr.mxu0 0.0
    %831 = vmatpush1.msra.mxu0 0.0
    %832 = vmatprep.subr.mxu0 0.0
    %833 = vmatpush1.msra.mxu0 0.0
    %834 = vmatprep.subr.mxu0 0.0
    %835 = vmatpush1.msra.mxu0 0.0
    %836 = vmatprep.subr.mxu0 0.0
    %837 = vmatpush1.msra.mxu0 0.0
    %838 = vmatprep.subr.mxu0 0.0
    %839 = vmatpush1.msra.mxu0 0.0
    %840 = vmatprep.subr.mxu0 0.0
    %841 = vmatpush1.msra.mxu0 0.0
    %842 = vmatprep.subr.mxu0 0.0
    %843 = vmatpush1.msra.mxu0 0.0
    %844 = vmatprep.subr.mxu0 0.0
    %845 = vmatpush1.msra.mxu0 0.0
    %846 = vmatprep.subr.mxu0 0.0
    %847 = vmatpush1.msra.mxu0 0.0
    %848 = vmatprep.subr.mxu0 0.0
    %849 = vmatpush1.msra.mxu0 0.0
    %850 = vmatprep.subr.mxu0 0.0
    %851 = vmatpush1.msra.mxu0 0.0
    %852 = vmatprep.subr.mxu0 0.0
    %853 = vmatpush1.msra.mxu0 0.0
    %854 = vmatprep.subr.mxu0 0.0
    %855 = vmatpush1.msra.mxu0 0.0
    %856 = vmatprep.mubr.f32.mxu0 0.0
    %857 = vmatmul.mubr.f32.gmra.mrb[0].mxu0 %v790
    %v858 = vpop.f32.mrb[0].mxu0
    %v859 = vadd.f32 0.0, %v858
    %v860 = vpop.f32.mrb[0].mxu0
    %861 = vdwg.mxu0
    %v863 = vsel %vm692, %v774, 0
    %865 = vmatprep.subr.mxu0 0.0
    %866 = vmatpush1.msra.mxu0 %v782
    %867 = vmatprep.subr.mxu0 0.0
    %868 = vmatpush1.msra.mxu0 0.0
    %869 = vmatprep.subr.mxu0 0.0
    %870 = vmatpush1.msra.mxu0 0.0
    %871 = vmatprep.subr.mxu0 0.0
    %872 = vmatpush1.msra.mxu0 0.0
    %873 = vmatprep.subr.mxu0 0.0
    %874 = vmatpush1.msra.mxu0 0.0
    %875 = vmatprep.subr.mxu0 0.0
    %876 = vmatpush1.msra.mxu0 0.0
    %877 = vmatprep.subr.mxu0 0.0
    %878 = vmatpush1.msra.mxu0 0.0
    %879 = vmatprep.subr.mxu0 0.0
    %880 = vmatpush1.msra.mxu0 0.0
    %881 = vmatprep.subr.mxu0 0.0
    %882 = vmatpush1.msra.mxu0 0.0
    %883 = vmatprep.subr.mxu0 0.0
    %884 = vmatpush1.msra.mxu0 0.0
    %885 = vmatprep.subr.mxu0 0.0
    %886 = vmatpush1.msra.mxu0 0.0
    %887 = vmatprep.subr.mxu0 0.0
    %888 = vmatpush1.msra.mxu0 0.0
    %889 = vmatprep.subr.mxu0 0.0
    %890 = vmatpush1.msra.mxu0 0.0
    %891 = vmatprep.subr.mxu0 0.0
    %892 = vmatpush1.msra.mxu0 0.0
    %893 = vmatprep.subr.mxu0 0.0
    %894 = vmatpush1.msra.mxu0 0.0
    %895 = vmatprep.subr.mxu0 0.0
    %896 = vmatpush1.msra.mxu0 0.0
    %897 = vmatprep.subr.mxu0 0.0
    %898 = vmatpush1.msra.mxu0 0.0
    %899 = vmatprep.subr.mxu0 0.0
    %900 = vmatpush1.msra.mxu0 0.0
    %901 = vmatprep.subr.mxu0 0.0
    %902 = vmatpush1.msra.mxu0 0.0
    %903 = vmatprep.subr.mxu0 0.0
    %904 = vmatpush1.msra.mxu0 0.0
    %905 = vmatprep.subr.mxu0 0.0
    %906 = vmatpush1.msra.mxu0 0.0
    %907 = vmatprep.subr.mxu0 0.0
    %908 = vmatpush1.msra.mxu0 0.0
    %909 = vmatprep.subr.mxu0 0.0
    %910 = vmatpush1.msra.mxu0 0.0
    %911 = vmatprep.subr.mxu0 0.0
    %912 = vmatpush1.msra.mxu0 0.0
    %913 = vmatprep.subr.mxu0 0.0
    %914 = vmatpush1.msra.mxu0 0.0
    %915 = vmatprep.subr.mxu0 0.0
    %916 = vmatpush1.msra.mxu0 0.0
    %917 = vmatprep.subr.mxu0 0.0
    %918 = vmatpush1.msra.mxu0 0.0
    %919 = vmatprep.subr.mxu0 0.0
    %920 = vmatpush1.msra.mxu0 0.0
    %921 = vmatprep.subr.mxu0 0.0
    %922 = vmatpush1.msra.mxu0 0.0
    %923 = vmatprep.subr.mxu0 0.0
    %924 = vmatpush1.msra.mxu0 0.0
    %925 = vmatprep.subr.mxu0 0.0
    %926 = vmatpush1.msra.mxu0 0.0
    %927 = vmatprep.subr.mxu0 0.0
    %928 = vmatpush1.msra.mxu0 0.0
    %929 = vmatprep.mubr.f32.mxu0 0.0
    %930 = vmatmul.mubr.f32.gmra.mrb[0].mxu0 %v863
    %v931 = vpop.f32.mrb[0].mxu0
    %v932 = vadd.f32 0.0, %v931
    %v933 = vpop.f32.mrb[0].mxu0
    %934 = vdwg.mxu0
    %v936 = vsel %vm692, %v775, 0
    %938 = vmatprep.subr.mxu0 0.0
    %939 = vmatpush1.msra.mxu0 %v783
    %940 = vmatprep.subr.mxu0 0.0
    %941 = vmatpush1.msra.mxu0 0.0
    %942 = vmatprep.subr.mxu0 0.0
    %943 = vmatpush1.msra.mxu0 0.0
    %944 = vmatprep.subr.mxu0 0.0
    %945 = vmatpush1.msra.mxu0 0.0
    %946 = vmatprep.subr.mxu0 0.0
    %947 = vmatpush1.msra.mxu0 0.0
    %948 = vmatprep.subr.mxu0 0.0
    %949 = vmatpush1.msra.mxu0 0.0
    %950 = vmatprep.subr.mxu0 0.0
    %951 = vmatpush1.msra.mxu0 0.0
    %952 = vmatprep.subr.mxu0 0.0
    %953 = vmatpush1.msra.mxu0 0.0
    %954 = vmatprep.subr.mxu0 0.0
    %955 = vmatpush1.msra.mxu0 0.0
    %956 = vmatprep.subr.mxu0 0.0
    %957 = vmatpush1.msra.mxu0 0.0
    %958 = vmatprep.subr.mxu0 0.0
    %959 = vmatpush1.msra.mxu0 0.0
    %960 = vmatprep.subr.mxu0 0.0
    %961 = vmatpush1.msra.mxu0 0.0
    %962 = vmatprep.subr.mxu0 0.0
    %963 = vmatpush1.msra.mxu0 0.0
    %964 = vmatprep.subr.mxu0 0.0
    %965 = vmatpush1.msra.mxu0 0.0
    %966 = vmatprep.subr.mxu0 0.0
    %967 = vmatpush1.msra.mxu0 0.0
    %968 = vmatprep.subr.mxu0 0.0
    %969 = vmatpush1.msra.mxu0 0.0
    %970 = vmatprep.subr.mxu0 0.0
    %971 = vmatpush1.msra.mxu0 0.0
    %972 = vmatprep.subr.mxu0 0.0
    %973 = vmatpush1.msra.mxu0 0.0
    %974 = vmatprep.subr.mxu0 0.0
    %975 = vmatpush1.msra.mxu0 0.0
    %976 = vmatprep.subr.mxu0 0.0
    %977 = vmatpush1.msra.mxu0 0.0
    %978 = vmatprep.subr.mxu0 0.0
    %979 = vmatpush1.msra.mxu0 0.0
    %980 = vmatprep.subr.mxu0 0.0
    %981 = vmatpush1.msra.mxu0 0.0
    %982 = vmatprep.subr.mxu0 0.0
    %983 = vmatpush1.msra.mxu0 0.0
    %984 = vmatprep.subr.mxu0 0.0
    %985 = vmatpush1.msra.mxu0 0.0
    %986 = vmatprep.subr.mxu0 0.0
    %987 = vmatpush1.msra.mxu0 0.0
    %988 = vmatprep.subr.mxu0 0.0
    %989 = vmatpush1.msra.mxu0 0.0
    %990 = vmatprep.subr.mxu0 0.0
    %991 = vmatpush1.msra.mxu0 0.0
    %992 = vmatprep.subr.mxu0 0.0
    %993 = vmatpush1.msra.mxu0 0.0
    %994 = vmatprep.subr.mxu0 0.0
    %995 = vmatpush1.msra.mxu0 0.0
    %996 = vmatprep.subr.mxu0 0.0
    %997 = vmatpush1.msra.mxu0 0.0
    %998 = vmatprep.subr.mxu0 0.0
    %999 = vmatpush1.msra.mxu0 0.0
    %1000 = vmatprep.subr.mxu0 0.0
    %1001 = vmatpush1.msra.mxu0 0.0
    %1002 = vmatprep.mubr.f32.mxu0 0.0
    %1003 = vmatmul.mubr.f32.gmra.mrb[0].mxu0 %v936
    %v1004 = vpop.f32.mrb[0].mxu0
    %v1005 = vadd.f32 0.0, %v1004
    %v1006 = vpop.f32.mrb[0].mxu0
    %1007 = vdwg.mxu0
    %v1009 = vsel %vm692, %v776, 0
    %1011 = vmatprep.subr.mxu0 0.0
    %1012 = vmatpush1.msra.mxu0 %v784
    %1013 = vmatprep.subr.mxu0 0.0
    %1014 = vmatpush1.msra.mxu0 0.0
    %1015 = vmatprep.subr.mxu0 0.0
    %1016 = vmatpush1.msra.mxu0 0.0
    %1017 = vmatprep.subr.mxu0 0.0
    %1018 = vmatpush1.msra.mxu0 0.0
    %1019 = vmatprep.subr.mxu0 0.0
    %1020 = vmatpush1.msra.mxu0 0.0
    %1021 = vmatprep.subr.mxu0 0.0
    %1022 = vmatpush1.msra.mxu0 0.0
    %1023 = vmatprep.subr.mxu0 0.0
    %1024 = vmatpush1.msra.mxu0 0.0
    %1025 = vmatprep.subr.mxu0 0.0
    %1026 = vmatpush1.msra.mxu0 0.0
    %1027 = vmatprep.subr.mxu0 0.0
    %1028 = vmatpush1.msra.mxu0 0.0
    %1029 = vmatprep.subr.mxu0 0.0
    %1030 = vmatpush1.msra.mxu0 0.0
    %1031 = vmatprep.subr.mxu0 0.0
    %1032 = vmatpush1.msra.mxu0 0.0
    %1033 = vmatprep.subr.mxu0 0.0
    %1034 = vmatpush1.msra.mxu0 0.0
    %1035 = vmatprep.subr.mxu0 0.0
    %1036 = vmatpush1.msra.mxu0 0.0
    %1037 = vmatprep.subr.mxu0 0.0
    %1038 = vmatpush1.msra.mxu0 0.0
    %1039 = vmatprep.subr.mxu0 0.0
    %1040 = vmatpush1.msra.mxu0 0.0
    %1041 = vmatprep.subr.mxu0 0.0
    %1042 = vmatpush1.msra.mxu0 0.0
    %1043 = vmatprep.subr.mxu0 0.0
    %1044 = vmatpush1.msra.mxu0 0.0
    %1045 = vmatprep.subr.mxu0 0.0
    %1046 = vmatpush1.msra.mxu0 0.0
    %1047 = vmatprep.subr.mxu0 0.0
    %1048 = vmatpush1.msra.mxu0 0.0
    %1049 = vmatprep.subr.mxu0 0.0
    %1050 = vmatpush1.msra.mxu0 0.0
    %1051 = vmatprep.subr.mxu0 0.0
    %1052 = vmatpush1.msra.mxu0 0.0
    %1053 = vmatprep.subr.mxu0 0.0
    %1054 = vmatpush1.msra.mxu0 0.0
    %1055 = vmatprep.subr.mxu0 0.0
    %1056 = vmatpush1.msra.mxu0 0.0
    %1057 = vmatprep.subr.mxu0 0.0
    %1058 = vmatpush1.msra.mxu0 0.0
    %1059 = vmatprep.subr.mxu0 0.0
    %1060 = vmatpush1.msra.mxu0 0.0
    %1061 = vmatprep.subr.mxu0 0.0
    %1062 = vmatpush1.msra.mxu0 0.0
    %1063 = vmatprep.subr.mxu0 0.0
    %1064 = vmatpush1.msra.mxu0 0.0
    %1065 = vmatprep.subr.mxu0 0.0
    %1066 = vmatpush1.msra.mxu0 0.0
    %1067 = vmatprep.subr.mxu0 0.0
    %1068 = vmatpush1.msra.mxu0 0.0
    %1069 = vmatprep.subr.mxu0 0.0
    %1070 = vmatpush1.msra.mxu0 0.0
    %1071 = vmatprep.subr.mxu0 0.0
    %1072 = vmatpush1.msra.mxu0 0.0
    %1073 = vmatprep.subr.mxu0 0.0
    %1074 = vmatpush1.msra.mxu0 0.0
    %1075 = vmatprep.mubr.f32.mxu0 0.0
    %1076 = vmatmul.mubr.f32.gmra.mrb[0].mxu0 %v1009
    %v1077 = vpop.f32.mrb[0].mxu0
    %v1078 = vadd.f32 0.0, %v1077
    %v1079 = vpop.f32.mrb[0].mxu0
    %1080 = vdwg.mxu0
    %v1082 = vsel %vm692, %v777, 0
    %1084 = vmatprep.subr.mxu0 0.0
    %1085 = vmatpush1.msra.mxu0 %v785
    %1086 = vmatprep.subr.mxu0 0.0
    %1087 = vmatpush1.msra.mxu0 0.0
    %1088 = vmatprep.subr.mxu0 0.0
    %1089 = vmatpush1.msra.mxu0 0.0
    %1090 = vmatprep.subr.mxu0 0.0
    %1091 = vmatpush1.msra.mxu0 0.0
    %1092 = vmatprep.subr.mxu0 0.0
    %1093 = vmatpush1.msra.mxu0 0.0
    %1094 = vmatprep.subr.mxu0 0.0
    %1095 = vmatpush1.msra.mxu0 0.0
    %1096 = vmatprep.subr.mxu0 0.0
    %1097 = vmatpush1.msra.mxu0 0.0
    %1098 = vmatprep.subr.mxu0 0.0
    %1099 = vmatpush1.msra.mxu0 0.0
    %1100 = vmatprep.subr.mxu0 0.0
    %1101 = vmatpush1.msra.mxu0 0.0
    %1102 = vmatprep.subr.mxu0 0.0
    %1103 = vmatpush1.msra.mxu0 0.0
    %1104 = vmatprep.subr.mxu0 0.0
    %1105 = vmatpush1.msra.mxu0 0.0
    %1106 = vmatprep.subr.mxu0 0.0
    %1107 = vmatpush1.msra.mxu0 0.0
    %1108 = vmatprep.subr.mxu0 0.0
    %1109 = vmatpush1.msra.mxu0 0.0
    %1110 = vmatprep.subr.mxu0 0.0
    %1111 = vmatpush1.msra.mxu0 0.0
    %1112 = vmatprep.subr.mxu0 0.0
    %1113 = vmatpush1.msra.mxu0 0.0
    %1114 = vmatprep.subr.mxu0 0.0
    %1115 = vmatpush1.msra.mxu0 0.0
    %1116 = vmatprep.subr.mxu0 0.0
    %1117 = vmatpush1.msra.mxu0 0.0
    %1118 = vmatprep.subr.mxu0 0.0
    %1119 = vmatpush1.msra.mxu0 0.0
    %1120 = vmatprep.subr.mxu0 0.0
    %1121 = vmatpush1.msra.mxu0 0.0
    %1122 = vmatprep.subr.mxu0 0.0
    %1123 = vmatpush1.msra.mxu0 0.0
    %1124 = vmatprep.subr.mxu0 0.0
    %1125 = vmatpush1.msra.mxu0 0.0
    %1126 = vmatprep.subr.mxu0 0.0
    %1127 = vmatpush1.msra.mxu0 0.0
    %1128 = vmatprep.subr.mxu0 0.0
    %1129 = vmatpush1.msra.mxu0 0.0
    %1130 = vmatprep.subr.mxu0 0.0
    %1131 = vmatpush1.msra.mxu0 0.0
    %1132 = vmatprep.subr.mxu0 0.0
    %1133 = vmatpush1.msra.mxu0 0.0
    %1134 = vmatprep.subr.mxu0 0.0
    %1135 = vmatpush1.msra.mxu0 0.0
    %1136 = vmatprep.subr.mxu0 0.0
    %1137 = vmatpush1.msra.mxu0 0.0
    %1138 = vmatprep.subr.mxu0 0.0
    %1139 = vmatpush1.msra.mxu0 0.0
    %1140 = vmatprep.subr.mxu0 0.0
    %1141 = vmatpush1.msra.mxu0 0.0
    %1142 = vmatprep.subr.mxu0 0.0
    %1143 = vmatpush1.msra.mxu0 0.0
    %1144 = vmatprep.subr.mxu0 0.0
    %1145 = vmatpush1.msra.mxu0 0.0
    %1146 = vmatprep.subr.mxu0 0.0
    %1147 = vmatpush1.msra.mxu0 0.0
    %1148 = vmatprep.mubr.f32.mxu0 0.0
    %1149 = vmatmul.mubr.f32.gmra.mrb[0].mxu0 %v1082
    %v1150 = vpop.f32.mrb[0].mxu0
    %v1151 = vadd.f32 0.0, %v1150
    %v1152 = vpop.f32.mrb[0].mxu0
    %1153 = vdwg.mxu0
    %v1155 = vsel %vm692, %v778, 0
    %1157 = vmatprep.subr.mxu0 0.0
    %1158 = vmatpush1.msra.mxu0 %v786
    %1159 = vmatprep.subr.mxu0 0.0
    %1160 = vmatpush1.msra.mxu0 0.0
    %1161 = vmatprep.subr.mxu0 0.0
    %1162 = vmatpush1.msra.mxu0 0.0
    %1163 = vmatprep.subr.mxu0 0.0
    %1164 = vmatpush1.msra.mxu0 0.0
    %1165 = vmatprep.subr.mxu0 0.0
    %1166 = vmatpush1.msra.mxu0 0.0
    %1167 = vmatprep.subr.mxu0 0.0
    %1168 = vmatpush1.msra.mxu0 0.0
    %1169 = vmatprep.subr.mxu0 0.0
    %1170 = vmatpush1.msra.mxu0 0.0
    %1171 = vmatprep.subr.mxu0 0.0
    %1172 = vmatpush1.msra.mxu0 0.0
    %1173 = vmatprep.subr.mxu0 0.0
    %1174 = vmatpush1.msra.mxu0 0.0
    %1175 = vmatprep.subr.mxu0 0.0
    %1176 = vmatpush1.msra.mxu0 0.0
    %1177 = vmatprep.subr.mxu0 0.0
    %1178 = vmatpush1.msra.mxu0 0.0
    %1179 = vmatprep.subr.mxu0 0.0
    %1180 = vmatpush1.msra.mxu0 0.0
    %1181 = vmatprep.subr.mxu0 0.0
    %1182 = vmatpush1.msra.mxu0 0.0
    %1183 = vmatprep.subr.mxu0 0.0
    %1184 = vmatpush1.msra.mxu0 0.0
    %1185 = vmatprep.subr.mxu0 0.0
    %1186 = vmatpush1.msra.mxu0 0.0
    %1187 = vmatprep.subr.mxu0 0.0
    %1188 = vmatpush1.msra.mxu0 0.0
    %1189 = vmatprep.subr.mxu0 0.0
    %1190 = vmatpush1.msra.mxu0 0.0
    %1191 = vmatprep.subr.mxu0 0.0
    %1192 = vmatpush1.msra.mxu0 0.0
    %1193 = vmatprep.subr.mxu0 0.0
    %1194 = vmatpush1.msra.mxu0 0.0
    %1195 = vmatprep.subr.mxu0 0.0
    %1196 = vmatpush1.msra.mxu0 0.0
    %1197 = vmatprep.subr.mxu0 0.0
    %1198 = vmatpush1.msra.mxu0 0.0
    %1199 = vmatprep.subr.mxu0 0.0
    %1200 = vmatpush1.msra.mxu0 0.0
    %1201 = vmatprep.subr.mxu0 0.0
    %1202 = vmatpush1.msra.mxu0 0.0
    %1203 = vmatprep.subr.mxu0 0.0
    %1204 = vmatpush1.msra.mxu0 0.0
    %1205 = vmatprep.subr.mxu0 0.0
    %1206 = vmatpush1.msra.mxu0 0.0
    %1207 = vmatprep.subr.mxu0 0.0
    %1208 = vmatpush1.msra.mxu0 0.0
    %1209 = vmatprep.subr.mxu0 0.0
    %1210 = vmatpush1.msra.mxu0 0.0
    %1211 = vmatprep.subr.mxu0 0.0
    %1212 = vmatpush1.msra.mxu0 0.0
    %1213 = vmatprep.subr.mxu0 0.0
    %1214 = vmatpush1.msra.mxu0 0.0
    %1215 = vmatprep.subr.mxu0 0.0
    %1216 = vmatpush1.msra.mxu0 0.0
    %1217 = vmatprep.subr.mxu0 0.0
    %1218 = vmatpush1.msra.mxu0 0.0
    %1219 = vmatprep.subr.mxu0 0.0
    %1220 = vmatpush1.msra.mxu0 0.0
    %1221 = vmatprep.mubr.f32.mxu0 0.0
    %1222 = vmatmul.mubr.f32.gmra.mrb[0].mxu0 %v1155
    %v1223 = vpop.f32.mrb[0].mxu0
    %v1224 = vadd.f32 0.0, %v1223
    %v1225 = vpop.f32.mrb[0].mxu0
    %1226 = vdwg.mxu0
    %v1228 = vsel %vm692, %v779, 0
    %1230 = vmatprep.subr.mxu0 0.0
    %1231 = vmatpush1.msra.mxu0 %v787
    %1232 = vmatprep.subr.mxu0 0.0
    %1233 = vmatpush1.msra.mxu0 0.0
    %1234 = vmatprep.subr.mxu0 0.0
    %1235 = vmatpush1.msra.mxu0 0.0
    %1236 = vmatprep.subr.mxu0 0.0
    %1237 = vmatpush1.msra.mxu0 0.0
    %1238 = vmatprep.subr.mxu0 0.0
    %1239 = vmatpush1.msra.mxu0 0.0
    %1240 = vmatprep.subr.mxu0 0.0
    %1241 = vmatpush1.msra.mxu0 0.0
    %1242 = vmatprep.subr.mxu0 0.0
    %1243 = vmatpush1.msra.mxu0 0.0
    %1244 = vmatprep.subr.mxu0 0.0
    %1245 = vmatpush1.msra.mxu0 0.0
    %1246 = vmatprep.subr.mxu0 0.0
    %1247 = vmatpush1.msra.mxu0 0.0
    %1248 = vmatprep.subr.mxu0 0.0
    %1249 = vmatpush1.msra.mxu0 0.0
    %1250 = vmatprep.subr.mxu0 0.0
    %1251 = vmatpush1.msra.mxu0 0.0
    %1252 = vmatprep.subr.mxu0 0.0
    %1253 = vmatpush1.msra.mxu0 0.0
    %1254 = vmatprep.subr.mxu0 0.0
    %1255 = vmatpush1.msra.mxu0 0.0
    %1256 = vmatprep.subr.mxu0 0.0
    %1257 = vmatpush1.msra.mxu0 0.0
    %1258 = vmatprep.subr.mxu0 0.0
    %1259 = vmatpush1.msra.mxu0 0.0
    %1260 = vmatprep.subr.mxu0 0.0
    %1261 = vmatpush1.msra.mxu0 0.0
    %1262 = vmatprep.subr.mxu0 0.0
    %1263 = vmatpush1.msra.mxu0 0.0
    %1264 = vmatprep.subr.mxu0 0.0
    %1265 = vmatpush1.msra.mxu0 0.0
    %1266 = vmatprep.subr.mxu0 0.0
    %1267 = vmatpush1.msra.mxu0 0.0
    %1268 = vmatprep.subr.mxu0 0.0
    %1269 = vmatpush1.msra.mxu0 0.0
    %1270 = vmatprep.subr.mxu0 0.0
    %1271 = vmatpush1.msra.mxu0 0.0
    %1272 = vmatprep.subr.mxu0 0.0
    %1273 = vmatpush1.msra.mxu0 0.0
    %1274 = vmatprep.subr.mxu0 0.0
    %1275 = vmatpush1.msra.mxu0 0.0
    %1276 = vmatprep.subr.mxu0 0.0
    %1277 = vmatpush1.msra.mxu0 0.0
    %1278 = vmatprep.subr.mxu0 0.0
    %1279 = vmatpush1.msra.mxu0 0.0
    %1280 = vmatprep.subr.mxu0 0.0
    %1281 = vmatpush1.msra.mxu0 0.0
    %1282 = vmatprep.subr.mxu0 0.0
    %1283 = vmatpush1.msra.mxu0 0.0
    %1284 = vmatprep.subr.mxu0 0.0
    %1285 = vmatpush1.msra.mxu0 0.0
    %1286 = vmatprep.subr.mxu0 0.0
    %1287 = vmatpush1.msra.mxu0 0.0
    %1288 = vmatprep.subr.mxu0 0.0
    %1289 = vmatpush1.msra.mxu0 0.0
    %1290 = vmatprep.subr.mxu0 0.0
    %1291 = vmatpush1.msra.mxu0 0.0
    %1292 = vmatprep.subr.mxu0 0.0
    %1293 = vmatpush1.msra.mxu0 0.0
    %1294 = vmatprep.mubr.f32.mxu0 0.0
    %1295 = vmatmul.mubr.f32.gmra.mrb[0].mxu0 %v1228
    %v1296 = vpop.f32.mrb[0].mxu0
    %v1297 = vadd.f32 0.0, %v1296
    %v1298 = vpop.f32.mrb[0].mxu0
    %1299 = vdwg.mxu0
    %v1301 = vsel %vm692, %v780, 0
    %1303 = vmatprep.subr.mxu0 0.0
    %1304 = vmatpush1.msra.mxu0 %v788
    %1305 = vmatprep.subr.mxu0 0.0
    %1306 = vmatpush1.msra.mxu0 0.0
    %1307 = vmatprep.subr.mxu0 0.0
    %1308 = vmatpush1.msra.mxu0 0.0
    %1309 = vmatprep.subr.mxu0 0.0
    %1310 = vmatpush1.msra.mxu0 0.0
    %1311 = vmatprep.subr.mxu0 0.0
    %1312 = vmatpush1.msra.mxu0 0.0
    %1313 = vmatprep.subr.mxu0 0.0
    %1314 = vmatpush1.msra.mxu0 0.0
    %1315 = vmatprep.subr.mxu0 0.0
    %1316 = vmatpush1.msra.mxu0 0.0
    %1317 = vmatprep.subr.mxu0 0.0
    %1318 = vmatpush1.msra.mxu0 0.0
    %1319 = vmatprep.subr.mxu0 0.0
    %1320 = vmatpush1.msra.mxu0 0.0
    %1321 = vmatprep.subr.mxu0 0.0
    %1322 = vmatpush1.msra.mxu0 0.0
    %1323 = vmatprep.subr.mxu0 0.0
    %1324 = vmatpush1.msra.mxu0 0.0
    %1325 = vmatprep.subr.mxu0 0.0
    %1326 = vmatpush1.msra.mxu0 0.0
    %1327 = vmatprep.subr.mxu0 0.0
    %1328 = vmatpush1.msra.mxu0 0.0
    %1329 = vmatprep.subr.mxu0 0.0
    %1330 = vmatpush1.msra.mxu0 0.0
    %1331 = vmatprep.subr.mxu0 0.0
    %1332 = vmatpush1.msra.mxu0 0.0
    %1333 = vmatprep.subr.mxu0 0.0
    %1334 = vmatpush1.msra.mxu0 0.0
    %1335 = vmatprep.subr.mxu0 0.0
    %1336 = vmatpush1.msra.mxu0 0.0
    %1337 = vmatprep.subr.mxu0 0.0
    %1338 = vmatpush1.msra.mxu0 0.0
    %1339 = vmatprep.subr.mxu0 0.0
    %1340 = vmatpush1.msra.mxu0 0.0
    %1341 = vmatprep.subr.mxu0 0.0
    %1342 = vmatpush1.msra.mxu0 0.0
    %1343 = vmatprep.subr.mxu0 0.0
    %1344 = vmatpush1.msra.mxu0 0.0
    %1345 = vmatprep.subr.mxu0 0.0
    %1346 = vmatpush1.msra.mxu0 0.0
    %1347 = vmatprep.subr.mxu0 0.0
    %1348 = vmatpush1.msra.mxu0 0.0
    %1349 = vmatprep.subr.mxu0 0.0
    %1350 = vmatpush1.msra.mxu0 0.0
    %1351 = vmatprep.subr.mxu0 0.0
    %1352 = vmatpush1.msra.mxu0 0.0
    %1353 = vmatprep.subr.mxu0 0.0
    %1354 = vmatpush1.msra.mxu0 0.0
    %1355 = vmatprep.subr.mxu0 0.0
    %1356 = vmatpush1.msra.mxu0 0.0
    %1357 = vmatprep.subr.mxu0 0.0
    %1358 = vmatpush1.msra.mxu0 0.0
    %1359 = vmatprep.subr.mxu0 0.0
    %1360 = vmatpush1.msra.mxu0 0.0
    %1361 = vmatprep.subr.mxu0 0.0
    %1362 = vmatpush1.msra.mxu0 0.0
    %1363 = vmatprep.subr.mxu0 0.0
    %1364 = vmatpush1.msra.mxu0 0.0
    %1365 = vmatprep.subr.mxu0 0.0
    %1366 = vmatpush1.msra.mxu0 0.0
    %1367 = vmatprep.mubr.f32.mxu0 0.0
    %1368 = vmatmul.mubr.f32.gmra.mrb[0].mxu0 %v1301
    %v1369 = vpop.f32.mrb[0].mxu0
    %v1370 = vadd.f32 0.0, %v1369
    %v1371 = vpop.f32.mrb[0].mxu0
    %1372 = vdwg.mxu0
    %1373 = vst.msk [vmem:[#allocation8] sm:$0xff] %vm75, %v859
    %1374 = vst.msk [vmem:[#allocation8 + $0x8] sm:$0xff] %vm75, %v932
    %1375 = vst.msk [vmem:[#allocation8 + $0x10] sm:$0xff] %vm75, %v1005
    %1376 = vst.msk [vmem:[#allocation8 + $0x18] sm:$0xff] %vm75, %v1078
    %1377 = vst.msk [vmem:[#allocation8 + $0x20] sm:$0xff] %vm75, %v1151
    %1378 = vst.msk [vmem:[#allocation8 + $0x28] sm:$0xff] %vm75, %v1224
    %1379 = vst.msk [vmem:[#allocation8 + $0x30] sm:$0xff] %vm75, %v1297
    %1380 = vst.msk [vmem:[#allocation8 + $0x38] sm:$0xff] %vm75, %v1370
    %1381 = vst.msk [vmem:[#allocation9] sm:$0xff] %vm692, %v773
    %1382 = vst.msk [vmem:[#allocation9 + $0x8] sm:$0xff] %vm692, %v774
    %1383 = vst.msk [vmem:[#allocation9 + $0x10] sm:$0xff] %vm692, %v775
    %1384 = vst.msk [vmem:[#allocation9 + $0x18] sm:$0xff] %vm692, %v776
    %1385 = vst.msk [vmem:[#allocation9 + $0x20] sm:$0xff] %vm692, %v777
    %1386 = vst.msk [vmem:[#allocation9 + $0x28] sm:$0xff] %vm692, %v778
    %1387 = vst.msk [vmem:[#allocation9 + $0x30] sm:$0xff] %vm692, %v779
    %1388 = vst.msk [vmem:[#allocation9 + $0x38] sm:$0xff] %vm692, %v780
    // Predicated region
    $region26: #{tpu_custom_call.1} parent=1 // pred_check
      _
    $region27: #{tpu_custom_call.1} parent=1 // pred_check_branch
      %1390 = sbr.rel (0) target = $region29
    $region28: #{tpu_custom_call.1} parent=1 // pred_region
      %s1392 = ssub.s32 1024, 1024
      %1393 = vsyncadd [#allocation4], %s1392
      %s1394 = sshll.u32 [#allocation8], 4
      %s1395 = int_to_ptr.vmem [resolvable:$true] %s1394
      %1400 = dma.vmem_to_hbm [thread:$0]  %s1395, 1024, %s3, [#allocation4], 128, 128, 8
    $region29: #{tpu_custom_call.1} parent=1 // pred_fallthru
      _
    // Predicated region
    $region30: #{tpu_custom_call.1} parent=1 // pred_check
      _
    $region31: #{tpu_custom_call.1} parent=1 // pred_check_branch
      %1402 = sbr.rel (0) target = $region33
    $region32: #{tpu_custom_call.1} parent=1 // pred_region
      %s1404 = ssub.s32 1024, 1024
      %1405 = vsyncadd [#allocation10], %s1404
      %s1406 = sshll.u32 [#allocation9], 4
      %s1407 = int_to_ptr.vmem [resolvable:$true] %s1406
      %1412 = dma.vmem_to_hbm [thread:$0]  %s1407, 1024, %s4, [#allocation10], 128, 128, 8
    $region33: #{tpu_custom_call.1} parent=1 // pred_fallthru
      _
    // Predicated region
    $region34: #{tpu_custom_call.1} parent=1 // pred_check
      _
    $region35: #{tpu_custom_call.1} parent=1 // pred_check_branch
      %1414 = sbr.rel (0) target = $region37
    $region36: #{tpu_custom_call.1} parent=1 // pred_region
      %1415 = dma.done [#allocation4], 1024
    $region37: #{tpu_custom_call.1} parent=1 // pred_fallthru
      _
    // Predicated region
    $region38: #{tpu_custom_call.1} parent=1 // pred_check
      _
    $region39: #{tpu_custom_call.1} parent=1 // pred_check_branch
      %1417 = sbr.rel (0) target = $region41
    $region40: #{tpu_custom_call.1} parent=1 // pred_region
      %1418 = dma.done [#allocation10], 1024
    $region41: #{tpu_custom_call.1} parent=1 // pred_fallthru
      _
    %1419 = vsyncpa [#allocation3], 1
    %1420 = vsyncpa [#allocation6], 1
    %1421 = vsyncpa [#allocation4], 1
    %1422 = vsyncpa [#allocation10], 1

</llo_original>
